<compile_context>
chip_gen: v7x
topology: tpu7x:2x2x1
jax: 0.10.0
libtpu: 0.0.40
codegen_flags: <defaults>
</compile_context>

<pallas_src>
import functools

import jax
import jax.numpy as jnp
from jax.experimental import pallas as pl
from jax.experimental.pallas import tpu as pltpu


# ---------------------------------------------------------------------------
# hardware-aware constants / small helpers
# ---------------------------------------------------------------------------
def _detect_vmem_limit():
    """Per-generation scoped-VMEM ceiling (~72% of physical, capped at 100MiB).

    v5e/v6e (128 MiB VMEM) -> ~92 MiB; v7x (64 MiB) -> ~46 MiB.
    Falls back to a 40 MiB limit that is safe on every generation.
    """
    try:
        info = pltpu.get_tpu_info()
        cap = int(info.vmem_capacity_bytes)
        return max(32 * 2**20, min(int(cap * 0.72), 100 * 2**20))
    except Exception:
        return 40 * 2**20


VMEM_LIMIT = _detect_vmem_limit()
_TM_HARD_CAP = 4096 if VMEM_LIMIT >= 80 * 2**20 else 2048  # conv row-tile cap
_LANE_CHUNK_CAP = 8192                                     # elementwise lane width


def _round_up(a, m):
    return ((a + m - 1) // m) * m


def _lane_chunk(L, cap=_LANE_CHUNK_CAP):
    """Largest multiple-of-128 divisor of L <= cap; prefers >=2 chunks so the
    memory-bound elementwise kernels can be split across v7x's two cores."""
    if L % 128 != 0:
        return L
    if L >= 2048:
        cap = min(cap, max(128, L // 2))
    if L <= cap:
        return L
    best = 128
    d = 256
    while d <= cap:
        if L % d == 0:
            best = d
        d += 128
    return best


def _pick_tm(m_out, w8, c_eff, tn, out_bytes):
    """Adaptive conv row tile: the largest multiple of 8 that keeps the
    resident image, weights, output blocks and f32 intermediates in VMEM."""
    m8 = _round_up(max(m_out, 8), 8)
    budget = int(VMEM_LIMIT * 0.7)
    mx_est = m8 + _TM_HARD_CAP + 2 * w8 + 8                 # image rows upper bound
    fixed = 2 * mx_est * c_eff * 2 + 2 * 9 * c_eff * tn * 2 + 4 * tn * 8
    per_row = 2 * tn * out_bytes + 3 * tn * 4 + 4 * c_eff + 16
    avail = budget - fixed
    cap = max(512, min(_TM_HARD_CAP, avail // per_row)) if avail > 0 else 512
    if m8 <= cap:
        return m8
    nt = -(-m8 // cap)                                      # number of tiles
    return _round_up(-(-m8 // nt), 8)


# ---------------------------------------------------------------------------
# Pallas kernels
# ---------------------------------------------------------------------------
def _conv3x3_kernel(*refs, tm, w8, act, fuse_bn):
    """Fused im2col-free 3x3 valid conv (+ optional fused input BN+ReLU).

    x_ref: (1, Mx, C)  row-flattened image (width padded to w8), bf16, resident
    w_ref: (9, C, TN)  per-tap weight matrices, bf16
    b_ref: (1, TN)     bias, f32
    s_ref/t_ref (optional): (1, C) f32 per-channel BN scale/shift for the input
    o_ref: (1, TM, TN) output tile (flattened output rows at width w8)
    """
    if fuse_bn:
        x_ref, w_ref, b_ref, s_ref, t_ref, o_ref = refs
    else:
        x_ref, w_ref, b_ref, o_ref = refs
    m0 = pl.program_id(2) * tm
    acc = None
    for kx in range(3):
        part = None
        for ky in range(3):
            start = pl.multiple_of(m0 + ky * w8, 8)
            xs = x_ref[0, pl.ds(start, tm + 8), :]                # (TM+8, C) bf16
            if fuse_bn:
                xs = jnp.maximum(
                    xs.astype(jnp.float32) * s_ref[...] + t_ref[...],
                    0.0).astype(jnp.bfloat16)
            d = jnp.dot(xs, w_ref[ky * 3 + kx],
                        preferred_element_type=jnp.float32)       # (TM+8, TN) f32
            part = d if part is None else part + d
        # TODO(synk): replace the misaligned f32 slice with an XLU roll once
        # verified on all generations (few-% ld/st win on the small-C layers).
        sh = part[kx:kx + tm, :] if kx else part[:tm, :]           # column-tap shift
        acc = sh if acc is None else acc + sh
    y = acc + b_ref[...]
    if act == "relu":
        y = jnp.maximum(y, 0.0)
    elif act == "sigmoid":
        y = jax.nn.sigmoid(y)
    o_ref[0] = y.astype(o_ref.dtype)


def _matmul_bias_kernel(x_ref, w_ref, b_ref, o_ref, *, act):
    y = jnp.dot(x_ref[...], w_ref[...],
                preferred_element_type=jnp.float32) + b_ref[...]
    if act == "relu":
        y = jnp.maximum(y, 0.0)
    elif act == "sigmoid":
        y = jax.nn.sigmoid(y)
    o_ref[...] = y.astype(o_ref.dtype)


def _bn_stats_kernel(x_ref, sum_ref, sq_ref):
    x = x_ref[...].astype(jnp.float32)
    sum_ref[...] = jnp.sum(x, axis=0, keepdims=True)
    sq_ref[...] = jnp.sum(x * x, axis=0, keepdims=True)


def _scale_shift_relu_kernel(x_ref, s_ref, t_ref, o_ref):
    y = x_ref[...].astype(jnp.float32) * s_ref[...] + t_ref[...]
    o_ref[...] = jnp.maximum(y, 0.0).astype(o_ref.dtype)


def _max4_kernel(a_ref, b_ref, c_ref, d_ref, o_ref):
    o_ref[...] = jnp.maximum(jnp.maximum(a_ref[...], b_ref[...]),
                             jnp.maximum(c_ref[...], d_ref[...]))


# ---------------------------------------------------------------------------
# layer wrappers (NHWC feature maps, bf16 activations)
# ---------------------------------------------------------------------------
def conv2d_3x3(x, w_oihw, bias, act="none", in_scale=None, in_shift=None,
               out_dtype=jnp.bfloat16):
    """Valid (no padding) 3x3 conv: fused Pallas kernel, no im2col in HBM.

    If in_scale/in_shift are given, relu(x*scale+shift) is applied per channel
    to each loaded slab inside the kernel (fused BatchNorm+ReLU on the input),
    removing a full HBM normalize pass.
    """
    N, H, W, C = x.shape
    OC = w_oihw.shape[0]
    Ho, Wo = H - 2, W - 2
    fuse_bn = in_scale is not None

    # pad channels up to 8 lanes minimum (first layer has C=1)
    c_eff = max(C, 8)
    if c_eff != C:
        x = jnp.pad(x, ((0, 0), (0, 0), (0, 0), (0, c_eff - C)))
        w_oihw = jnp.pad(w_oihw, ((0, 0), (0, c_eff - C), (0, 0), (0, 0)))

    w8 = _round_up(W, 8)                       # padded image width
    m_out = Ho * w8                            # flattened output rows (with pad cols)

    # TODO(synk): for OC=64 layers the 64-lane output blocks still produce
    # masked stores; restructuring to a >=128-lane output slab is future work.
    tn = OC if OC <= 256 else 256
    assert OC % tn == 0, (OC, tn)
    out_bytes = jnp.dtype(out_dtype).itemsize
    tm = _pick_tm(m_out, w8, c_eff, tn, out_bytes)
    assert tm % 8 == 0 and w8 % 8 == 0, (tm, w8)
    m_pad = _round_up(m_out, tm)
    mx = m_pad + 2 * w8 + 8                    # input rows incl. tap-reach tail

    xw = x
    if w8 != W:
        xw = jnp.pad(xw, ((0, 0), (0, 0), (0, w8 - W), (0, 0)))
    xf = xw.astype(jnp.bfloat16).reshape(N, H * w8, c_eff)
    xf = jnp.pad(xf, ((0, 0), (0, mx - H * w8), (0, 0)))

    wt = jnp.transpose(w_oihw, (2, 3, 1, 0)).reshape(9, c_eff, OC)
    wt = wt.astype(jnp.bfloat16)
    bt = bias.reshape(1, OC).astype(jnp.float32)

    inputs = [xf, wt, bt]
    in_specs = [
        # resident image (block index ignores the inner spatial axis).
        # TODO(synk): mark with pipeline_mode=pl.Buffered(1) once single-buffer
        # inputs are universally supported (halves the biggest VMEM consumer).
        pl.BlockSpec((1, mx, c_eff), lambda n, j, i: (n, 0, 0)),
        pl.BlockSpec((9, c_eff, tn), lambda n, j, i: (0, 0, j)),
        pl.BlockSpec((1, tn), lambda n, j, i: (0, j)),
    ]
    if fuse_bn:
        s2 = in_scale.reshape(1, C).astype(jnp.float32)
        t2 = in_shift.reshape(1, C).astype(jnp.float32)
        if c_eff != C:
            s2 = jnp.pad(s2, ((0, 0), (0, c_eff - C)))
            t2 = jnp.pad(t2, ((0, 0), (0, c_eff - C)))
        inputs += [s2, t2]
        in_specs += [pl.BlockSpec((1, c_eff), lambda n, j, i: (0, 0)),
                     pl.BlockSpec((1, c_eff), lambda n, j, i: (0, 0))]

    grid = (N, OC // tn, m_pad // tm)          # weights outer, spatial rows inner

    out = pl.pallas_call(
        functools.partial(_conv3x3_kernel, tm=tm, w8=w8, act=act,
                          fuse_bn=fuse_bn),
        out_shape=jax.ShapeDtypeStruct((N, m_pad, OC), out_dtype),
        grid=grid,
        in_specs=in_specs,
        out_specs=pl.BlockSpec((1, tm, tn), lambda n, j, i: (n, i, j)),
        compiler_params=pltpu.CompilerParams(
            # every (n, j, i) writes a distinct output block -> all parallel
            dimension_semantics=("parallel", "parallel", "parallel"),
            vmem_limit_bytes=VMEM_LIMIT),
    )(*inputs)

    # drop the padded columns / tail rows -> clean (N, Ho, Wo, OC)
    # TODO(synk): keep feature maps in the padded (m_pad, w8) layout end-to-end
    # (masking pad columns in BN/pool) to remove this crop + re-pad HBM glue.
    out = out[:, :m_out, :].reshape(N, Ho, w8, OC)[:, :, :Wo, :]
    return out


def matmul_bias(x, w, b, act="none", out_dtype=jnp.bfloat16):
    """Small (M,K)@(K,N)+b with fused activation (ConvTranspose / 1x1 conv)."""
    M, K = x.shape
    n_out = w.shape[1]
    mp = _round_up(M, 8)
    if mp != M:
        x = jnp.pad(x, ((0, mp - M), (0, 0)))
    xb = x.astype(jnp.bfloat16)
    wb = w.astype(jnp.bfloat16)
    bb = b.reshape(1, n_out).astype(jnp.float32)
    tn = n_out if (n_out <= 512 or n_out % 256 != 0) else 256
    grid = (n_out // tn,)
    out = pl.pallas_call(
        functools.partial(_matmul_bias_kernel, act=act),
        out_shape=jax.ShapeDtypeStruct((mp, n_out), out_dtype),
        grid=grid,
        in_specs=[
            pl.BlockSpec((mp, K), lambda j: (0, 0)),
            pl.BlockSpec((K, tn), lambda j: (0, j)),
            pl.BlockSpec((1, tn), lambda j: (0, j)),
        ],
        out_specs=pl.BlockSpec((mp, tn), lambda j: (0, j)),
        compiler_params=pltpu.CompilerParams(
            dimension_semantics=("parallel",),
            vmem_limit_bytes=VMEM_LIMIT),
    )(xb, wb, bb)
    return out[:M]


def conv2d_1x1(x, w_oihw, bias, act="none", out_dtype=jnp.float32):
    N, H, W, C = x.shape
    OC = w_oihw.shape[0]
    wmat = jnp.transpose(w_oihw.reshape(OC, C), (1, 0))
    out = matmul_bias(x.reshape(-1, C), wmat, bias, act=act, out_dtype=out_dtype)
    return out.reshape(N, H, W, OC)


def conv_transpose_2x2(x, w_iohw, bias):
    """ConvTranspose2d(kernel=2, stride=2): non-overlapping sub-pixel matmul."""
    # TODO(synk): write the four (di,dj) sub-pixel blocks directly into the
    # (N, 2H, 2W, OC) layout via out_specs to avoid the XLA transpose copy.
    N, H, W, C = x.shape
    OC = w_iohw.shape[1]
    wcat = jnp.concatenate(
        [w_iohw[:, :, di, dj] for di in range(2) for dj in range(2)], axis=1)
    bcat = jnp.concatenate([bias] * 4, axis=0)
    y = matmul_bias(x.reshape(-1, C), wcat, bcat)            # (N*H*W, 4*OC)
    y = y.reshape(N, H, W, 2, 2, OC)                          # (n,i,j,di,dj,oc)
    y = jnp.transpose(y, (0, 1, 3, 2, 4, 5)).reshape(N, 2 * H, 2 * W, OC)
    return y


def bn_scale_shift(x, gamma, beta, eps=1e-5):
    """Training-mode BatchNorm2d statistics -> per-channel (scale, shift)."""
    N, H, W, C = x.shape
    R, L = N * H, W * C
    xv = x.reshape(R, L)                       # free view, lane dim = W*C
    tc = _lane_chunk(L)
    ssum, ssq = pl.pallas_call(
        _bn_stats_kernel,
        out_shape=(jax.ShapeDtypeStruct((1, L), jnp.float32),
                   jax.ShapeDtypeStruct((1, L), jnp.float32)),
        grid=(L // tc,),
        in_specs=[pl.BlockSpec((R, tc), lambda j: (0, j))],
        out_specs=[pl.BlockSpec((1, tc), lambda j: (0, j)),
                   pl.BlockSpec((1, tc), lambda j: (0, j))],
        compiler_params=pltpu.CompilerParams(
            dimension_semantics=("parallel",), vmem_limit_bytes=VMEM_LIMIT),
    )(xv)
    ssum = ssum.reshape(W, C).sum(axis=0)
    ssq = ssq.reshape(W, C).sum(axis=0)
    cnt = N * H * W
    mean = ssum / cnt
    var = ssq / cnt - mean * mean              # biased variance (training mode)
    # TODO(synk): use a shifted / Welford variance for tighter f32 parity.
    scale = gamma * jax.lax.rsqrt(var + eps)
    shift = beta - mean * scale
    return scale, shift


def scale_shift_relu(x, scale, shift):
    """Materialized relu(x*scale+shift) (only where the BN'd tensor is needed)."""
    N, H, W, C = x.shape
    R, L = N * H, W * C
    xv = x.reshape(R, L)
    tc = _lane_chunk(L)
    s_row = jnp.tile(scale.reshape(1, C), (W, 1)).reshape(1, L).astype(jnp.float32)
    t_row = jnp.tile(shift.reshape(1, C), (W, 1)).reshape(1, L).astype(jnp.float32)
    out = pl.pallas_call(
        _scale_shift_relu_kernel,
        out_shape=jax.ShapeDtypeStruct((R, L), jnp.bfloat16),
        grid=(L // tc,),
        in_specs=[pl.BlockSpec((R, tc), lambda j: (0, j)),
                  pl.BlockSpec((1, tc), lambda j: (0, j)),
                  pl.BlockSpec((1, tc), lambda j: (0, j))],
        out_specs=pl.BlockSpec((R, tc), lambda j: (0, j)),
        compiler_params=pltpu.CompilerParams(
            dimension_semantics=("parallel",), vmem_limit_bytes=VMEM_LIMIT),
    )(xv, s_row, t_row)
    return out.reshape(N, H, W, C)


def bn_relu(x, gamma, beta, eps=1e-5):
    s, t = bn_scale_shift(x, gamma, beta, eps)
    return scale_shift_relu(x, s, t)


def maxpool2x2(x):
    # TODO(synk): the 2x2 quadrant gathers are still JAX strided slices; only
    # the max reduction itself runs in Pallas (strided in-kernel loads would
    # cut the pool's HBM traffic ~3x).
    N, H, W, C = x.shape
    H2, W2 = H // 2, W // 2
    xc = x[:, :2 * H2, :2 * W2, :]
    R = N * H2
    L = W2 * C
    a = xc[:, 0::2, 0::2, :].reshape(R, L)
    b = xc[:, 0::2, 1::2, :].reshape(R, L)
    c = xc[:, 1::2, 0::2, :].reshape(R, L)
    d = xc[:, 1::2, 1::2, :].reshape(R, L)
    tc = _lane_chunk(L)
    out = pl.pallas_call(
        _max4_kernel,
        out_shape=jax.ShapeDtypeStruct((R, L), x.dtype),
        grid=(L // tc,),
        in_specs=[pl.BlockSpec((R, tc), lambda j: (0, j)) for _ in range(4)],
        out_specs=pl.BlockSpec((R, tc), lambda j: (0, j)),
        compiler_params=pltpu.CompilerParams(
            dimension_semantics=("parallel",), vmem_limit_bytes=VMEM_LIMIT),
    )(a, b, c, d)
    return out.reshape(N, H2, W2, C)


# ---------------------------------------------------------------------------
# UNet blocks
# ---------------------------------------------------------------------------
def down_step(x, p):
    x1 = conv2d_3x3(x, p["w1"], p["b1"])
    # BN stats on conv1 output; normalize+ReLU fused into conv2's input path.
    s, t = bn_scale_shift(x1, p["gamma"], p["beta"])
    x_down = conv2d_3x3(x1, p["w2"], p["b2"], in_scale=s, in_shift=t)
    # second relu(bn(.)) in the reference is overwritten by the maxpool -> skipped
    return maxpool2x2(x_down), x_down


def up_step(x, x_down, p):
    x = conv_transpose_2x2(x, p["wu"], p["bu"])
    diff = x_down.shape[1] - x.shape[1]
    d = diff // 2
    if diff % 2 == 0:
        x_down = x_down[:, d:x_down.shape[1] - d, d:x_down.shape[2] - d, :]
    else:
        x_down = x_down[:, d:x_down.shape[1] - d - 1,
                        d:x_down.shape[2] - d - 1, :]
    x = jnp.concatenate([x_down, x.astype(x_down.dtype)], axis=-1)  # torch.cat(dim=1)
    y1 = conv2d_3x3(x, p["w1"], p["b1"])
    s1, t1 = bn_scale_shift(y1, p["gamma"], p["beta"])
    y2 = conv2d_3x3(y1, p["w2"], p["b2"], in_scale=s1, in_shift=t1)
    return bn_relu(y2, p["gamma"], p["beta"])


def unet_forward(x_nchw, params):
    x = jnp.transpose(x_nchw, (0, 2, 3, 1)).astype(jnp.float32)  # NCHW -> NHWC
    d1, d1_dn = down_step(x, params["down1"])
    d2, d2_dn = down_step(d1, params["down2"])
    d3, d3_dn = down_step(d2, params["down3"])
    d4, d4_dn = down_step(d3, params["down4"])
    f = conv2d_3x3(d4, params["cw1"], params["cb1"], act="relu")
    f = conv2d_3x3(f, params["cw2"], params["cb2"])
    u = up_step(f, d4_dn, params["up1"])
    u = up_step(u, d3_dn, params["up2"])
    u = up_step(u, d2_dn, params["up3"])
    u = up_step(u, d1_dn, params["up4"])
    out = conv2d_1x1(u, params["cw3"], params["cb3"], act="sigmoid")
    return jnp.transpose(out, (0, 3, 1, 2))                      # NHWC -> NCHW


# ---------------------------------------------------------------------------
# deterministic parameter init (shapes follow the PyTorch module __init__)
# ---------------------------------------------------------------------------
def init_params(key, n_classes):
    keys = iter(jax.random.split(key, 64))

    def conv_w(oc, ic, k):
        std = (ic * k * k) ** -0.5
        return jax.random.normal(next(keys), (oc, ic, k, k), jnp.float32) * std

    def conv_b(oc):
        return jax.random.normal(next(keys), (oc,), jnp.float32) * 0.01

    def down(ic, oc):
        return dict(w1=conv_w(oc, ic, 3), b1=conv_b(oc),
                    w2=conv_w(oc, oc, 3), b2=conv_b(oc),
                    gamma=jnp.ones((oc,), jnp.float32),
                    beta=jnp.zeros((oc,), jnp.float32))

    def up(ic, oc):
        std = (ic * 2 * 2) ** -0.5
        wu = jax.random.normal(next(keys), (ic, oc, 2, 2), jnp.float32) * std
        return dict(wu=wu, bu=conv_b(oc),
                    w1=conv_w(oc, ic, 3), b1=conv_b(oc),
                    w2=conv_w(oc, oc, 3), b2=conv_b(oc),
                    gamma=jnp.ones((oc,), jnp.float32),
                    beta=jnp.zeros((oc,), jnp.float32))

    return dict(
        down1=down(1, 64), down2=down(64, 128),
        down3=down(128, 256), down4=down(256, 512),
        cw1=conv_w(1024, 512, 3), cb1=conv_b(1024),
        cw2=conv_w(1024, 1024, 3), cb2=conv_b(1024),
        up1=up(1024, 512), up2=up(512, 256),
        up3=up(256, 128), up4=up(128, 64),
        cw3=conv_w(n_classes, 64, 1), cb3=conv_b(n_classes),
    )


# ---------------------------------------------------------------------------
if __name__ == "__main__":
    n_classes = 2
    key = jax.random.PRNGKey(0)
    pkey, xkey, ckey = jax.random.split(key, 3)
    params = init_params(pkey, n_classes)

    # ---- micro-check: fused-BN 3x3 conv vs. lax.conv reference (bf16 inputs)
    k1, k2, k3, k4, k5 = jax.random.split(ckey, 5)
    xc = jax.random.normal(k1, (1, 12, 12, 8), jnp.float32)
    wc = jax.random.normal(k2, (16, 8, 3, 3), jnp.float32) * 0.2
    bc = jax.random.normal(k3, (16,), jnp.float32) * 0.1
    cs = jax.random.normal(k4, (8,), jnp.float32) * 0.5 + 1.0
    ct = jax.random.normal(k5, (8,), jnp.float32) * 0.2
    got = conv2d_3x3(xc, wc, bc, in_scale=cs, in_shift=ct, out_dtype=jnp.float32)
    a = jnp.maximum(xc.astype(jnp.bfloat16).astype(jnp.float32) * cs + ct, 0.0)
    a = a.astype(jnp.bfloat16).astype(jnp.float32)
    w_hwio = jnp.transpose(wc, (2, 3, 1, 0)).astype(jnp.bfloat16).astype(jnp.float32)
    ref = jax.lax.conv_general_dilated(
        a, w_hwio, (1, 1), "VALID",
        dimension_numbers=("NHWC", "HWIO", "NHWC")) + bc
    err = float(jnp.max(jnp.abs(got - ref)))
    mag = float(jnp.max(jnp.abs(ref))) + 1e-6
    assert err / mag < 1e-2, ("conv self-check failed", err, mag)

    # ---- full UNet forward
    # Smallest input for which all valid convs / crops stay positive: 188x188.
    x = jax.random.normal(xkey, (1, 1, 188, 188), jnp.float32)

    fwd = jax.jit(unet_forward)
    out = jax.block_until_ready(fwd(x, params))

    assert out.shape == (1, n_classes, 4, 4), out.shape
    assert bool(jnp.all(jnp.isfinite(out)))
    assert bool(jnp.all((out >= 0.0) & (out <= 1.0)))  # sigmoid output range
    print("KERNEL_OK")
</pallas_src>

<mosaic_0001>
module attributes {stable_mosaic.version = 11 : i64} {
  func.func @_conv3x3_kernel(%arg0: i32, %arg1: i32, %arg2: i32, %arg3: memref<1x200x8xbf16, #tpu.memory_space<vmem>>, %arg4: memref<9x8x16xbf16, #tpu.memory_space<vmem>>, %arg5: memref<1x16xf32, #tpu.memory_space<vmem>>, %arg6: memref<1x8xf32, #tpu.memory_space<vmem>>, %arg7: memref<1x8xf32, #tpu.memory_space<vmem>>, %arg8: memref<1x160x16xf32, #tpu.memory_space<vmem>>) attributes {dimension_semantics = [#tpu.dimension_semantics<parallel>, #tpu.dimension_semantics<parallel>, #tpu.dimension_semantics<parallel>], iteration_bounds = array<i64: 1, 1, 1>, scalar_prefetch = 0 : i64, scratch_operands = 0 : i64, tpu.core_type = #tpu.core_type<tc>, window_params = [{transform_indices = @transform_0, window_bounds = array<i64: 1, 200, 8>}, {transform_indices = @transform_1, window_bounds = array<i64: 9, 8, 16>}, {transform_indices = @transform_2, window_bounds = array<i64: 1, 16>}, {pipeline_mode = #tpu.pipeline_mode<synchronous>, transform_indices = @transform_3, window_bounds = array<i64: 1, 8>}, {pipeline_mode = #tpu.pipeline_mode<synchronous>, transform_indices = @transform_4, window_bounds = array<i64: 1, 8>}, {transform_indices = @transform_5, window_bounds = array<i64: 1, 160, 16>}]} {
    %c160_i32 = arith.constant 160 : i32
    %0 = arith.muli %arg2, %c160_i32 : i32
    %c0_i32 = arith.constant 0 : i32
    %1 = arith.addi %0, %c0_i32 : i32
    %2 = tpu.assume_multiple %1, 8 : i32
    %c0 = arith.constant 0 : index
    %3 = arith.index_cast %2 : i32 to index
    %c0_0 = arith.constant 0 : index
    %4 = vector.load %arg3[%c0, %3, %c0_0] : memref<1x200x8xbf16, #tpu.memory_space<vmem>>, vector<1x168x8xbf16>
    %5 = vector.shape_cast %4 : vector<1x168x8xbf16> to vector<168x8xbf16>
    %6 = arith.extf %5 : vector<168x8xbf16> to vector<168x8xf32>
    %c0_1 = arith.constant 0 : index
    %c0_2 = arith.constant 0 : index
    %7 = vector.load %arg6[%c0_1, %c0_2] : memref<1x8xf32, #tpu.memory_space<vmem>>, vector<1x8xf32>
    %8 = vector.broadcast %7 : vector<1x8xf32> to vector<168x8xf32>
    %9 = arith.mulf %6, %8 : vector<168x8xf32>
    %c0_3 = arith.constant 0 : index
    %c0_4 = arith.constant 0 : index
    %10 = vector.load %arg7[%c0_3, %c0_4] : memref<1x8xf32, #tpu.memory_space<vmem>>, vector<1x8xf32>
    %11 = vector.broadcast %10 : vector<1x8xf32> to vector<168x8xf32>
    %12 = arith.addf %9, %11 : vector<168x8xf32>
    %cst = arith.constant 0.000000e+00 : f32
    %13 = vector.broadcast %cst : f32 to vector<168x8xf32>
    %14 = arith.maximumf %12, %13 : vector<168x8xf32>
    %15 = arith.truncf %14 : vector<168x8xf32> to vector<168x8xbf16>
    %c0_5 = arith.constant 0 : index
    %c0_6 = arith.constant 0 : index
    %c0_7 = arith.constant 0 : index
    %16 = vector.load %arg4[%c0_5, %c0_6, %c0_7] : memref<9x8x16xbf16, #tpu.memory_space<vmem>>, vector<1x8x16xbf16>
    %17 = vector.shape_cast %16 : vector<1x8x16xbf16> to vector<8x16xbf16>
    %cst_8 = arith.constant dense<0.000000e+00> : vector<168x16xf32>
    %18 = tpu.matmul %15, %17, %cst_8 {dimension_numbers = #tpu.dot_dimension_numbers<[1], [0], [0], [1], [0, 0, 1, 1], [], []>} : vector<168x8xbf16>, vector<8x16xbf16>, vector<168x16xf32> -> vector<168x16xf32>
    %c16_i32 = arith.constant 16 : i32
    %19 = arith.addi %0, %c16_i32 : i32
    %20 = tpu.assume_multiple %19, 8 : i32
    %c0_9 = arith.constant 0 : index
    %21 = arith.index_cast %20 : i32 to index
    %c0_10 = arith.constant 0 : index
    %22 = vector.load %arg3[%c0_9, %21, %c0_10] : memref<1x200x8xbf16, #tpu.memory_space<vmem>>, vector<1x168x8xbf16>
    %23 = vector.shape_cast %22 : vector<1x168x8xbf16> to vector<168x8xbf16>
    %24 = arith.extf %23 : vector<168x8xbf16> to vector<168x8xf32>
    %c0_11 = arith.constant 0 : index
    %c0_12 = arith.constant 0 : index
    %25 = vector.load %arg6[%c0_11, %c0_12] : memref<1x8xf32, #tpu.memory_space<vmem>>, vector<1x8xf32>
    %26 = vector.broadcast %25 : vector<1x8xf32> to vector<168x8xf32>
    %27 = arith.mulf %24, %26 : vector<168x8xf32>
    %c0_13 = arith.constant 0 : index
    %c0_14 = arith.constant 0 : index
    %28 = vector.load %arg7[%c0_13, %c0_14] : memref<1x8xf32, #tpu.memory_space<vmem>>, vector<1x8xf32>
    %29 = vector.broadcast %28 : vector<1x8xf32> to vector<168x8xf32>
    %30 = arith.addf %27, %29 : vector<168x8xf32>
    %cst_15 = arith.constant 0.000000e+00 : f32
    %31 = vector.broadcast %cst_15 : f32 to vector<168x8xf32>
    %32 = arith.maximumf %30, %31 : vector<168x8xf32>
    %33 = arith.truncf %32 : vector<168x8xf32> to vector<168x8xbf16>
    %c3 = arith.constant 3 : index
    %c0_16 = arith.constant 0 : index
    %c0_17 = arith.constant 0 : index
    %34 = vector.load %arg4[%c3, %c0_16, %c0_17] : memref<9x8x16xbf16, #tpu.memory_space<vmem>>, vector<1x8x16xbf16>
    %35 = vector.shape_cast %34 : vector<1x8x16xbf16> to vector<8x16xbf16>
    %cst_18 = arith.constant dense<0.000000e+00> : vector<168x16xf32>
    %36 = tpu.matmul %33, %35, %cst_18 {dimension_numbers = #tpu.dot_dimension_numbers<[1], [0], [0], [1], [0, 0, 1, 1], [], []>} : vector<168x8xbf16>, vector<8x16xbf16>, vector<168x16xf32> -> vector<168x16xf32>
    %37 = arith.addf %18, %36 : vector<168x16xf32>
    %c32_i32 = arith.constant 32 : i32
    %38 = arith.addi %0, %c32_i32 : i32
    %39 = tpu.assume_multiple %38, 8 : i32
    %c0_19 = arith.constant 0 : index
    %40 = arith.index_cast %39 : i32 to index
    %c0_20 = arith.constant 0 : index
    %41 = vector.load %arg3[%c0_19, %40, %c0_20] : memref<1x200x8xbf16, #tpu.memory_space<vmem>>, vector<1x168x8xbf16>
    %42 = vector.shape_cast %41 : vector<1x168x8xbf16> to vector<168x8xbf16>
    %43 = arith.extf %42 : vector<168x8xbf16> to vector<168x8xf32>
    %c0_21 = arith.constant 0 : index
    %c0_22 = arith.constant 0 : index
    %44 = vector.load %arg6[%c0_21, %c0_22] : memref<1x8xf32, #tpu.memory_space<vmem>>, vector<1x8xf32>
    %45 = vector.broadcast %44 : vector<1x8xf32> to vector<168x8xf32>
    %46 = arith.mulf %43, %45 : vector<168x8xf32>
    %c0_23 = arith.constant 0 : index
    %c0_24 = arith.constant 0 : index
    %47 = vector.load %arg7[%c0_23, %c0_24] : memref<1x8xf32, #tpu.memory_space<vmem>>, vector<1x8xf32>
    %48 = vector.broadcast %47 : vector<1x8xf32> to vector<168x8xf32>
    %49 = arith.addf %46, %48 : vector<168x8xf32>
    %cst_25 = arith.constant 0.000000e+00 : f32
    %50 = vector.broadcast %cst_25 : f32 to vector<168x8xf32>
    %51 = arith.maximumf %49, %50 : vector<168x8xf32>
    %52 = arith.truncf %51 : vector<168x8xf32> to vector<168x8xbf16>
    %c6 = arith.constant 6 : index
    %c0_26 = arith.constant 0 : index
    %c0_27 = arith.constant 0 : index
    %53 = vector.load %arg4[%c6, %c0_26, %c0_27] : memref<9x8x16xbf16, #tpu.memory_space<vmem>>, vector<1x8x16xbf16>
    %54 = vector.shape_cast %53 : vector<1x8x16xbf16> to vector<8x16xbf16>
    %cst_28 = arith.constant dense<0.000000e+00> : vector<168x16xf32>
    %55 = tpu.matmul %52, %54, %cst_28 {dimension_numbers = #tpu.dot_dimension_numbers<[1], [0], [0], [1], [0, 0, 1, 1], [], []>} : vector<168x8xbf16>, vector<8x16xbf16>, vector<168x16xf32> -> vector<168x16xf32>
    %56 = arith.addf %37, %55 : vector<168x16xf32>
    %57 = vector.extract_strided_slice %56 {offsets = [0, 0], sizes = [160, 16], strides = [1, 1]} : vector<168x16xf32> to vector<160x16xf32>
    %c0_i32_29 = arith.constant 0 : i32
    %58 = arith.addi %0, %c0_i32_29 : i32
    %59 = tpu.assume_multiple %58, 8 : i32
    %c0_30 = arith.constant 0 : index
    %60 = arith.index_cast %59 : i32 to index
    %c0_31 = arith.constant 0 : index
    %61 = vector.load %arg3[%c0_30, %60, %c0_31] : memref<1x200x8xbf16, #tpu.memory_space<vmem>>, vector<1x168x8xbf16>
    %62 = vector.shape_cast %61 : vector<1x168x8xbf16> to vector<168x8xbf16>
    %63 = arith.extf %62 : vector<168x8xbf16> to vector<168x8xf32>
    %c0_32 = arith.constant 0 : index
    %c0_33 = arith.constant 0 : index
    %64 = vector.load %arg6[%c0_32, %c0_33] : memref<1x8xf32, #tpu.memory_space<vmem>>, vector<1x8xf32>
    %65 = vector.broadcast %64 : vector<1x8xf32> to vector<168x8xf32>
    %66 = arith.mulf %63, %65 : vector<168x8xf32>
    %c0_34 = arith.constant 0 : index
    %c0_35 = arith.constant 0 : index
    %67 = vector.load %arg7[%c0_34, %c0_35] : memref<1x8xf32, #tpu.memory_space<vmem>>, vector<1x8xf32>
    %68 = vector.broadcast %67 : vector<1x8xf32> to vector<168x8xf32>
    %69 = arith.addf %66, %68 : vector<168x8xf32>
    %cst_36 = arith.constant 0.000000e+00 : f32
    %70 = vector.broadcast %cst_36 : f32 to vector<168x8xf32>
    %71 = arith.maximumf %69, %70 : vector<168x8xf32>
    %72 = arith.truncf %71 : vector<168x8xf32> to vector<168x8xbf16>
    %c1 = arith.constant 1 : index
    %c0_37 = arith.constant 0 : index
    %c0_38 = arith.constant 0 : index
    %73 = vector.load %arg4[%c1, %c0_37, %c0_38] : memref<9x8x16xbf16, #tpu.memory_space<vmem>>, vector<1x8x16xbf16>
    %74 = vector.shape_cast %73 : vector<1x8x16xbf16> to vector<8x16xbf16>
    %cst_39 = arith.constant dense<0.000000e+00> : vector<168x16xf32>
    %75 = tpu.matmul %72, %74, %cst_39 {dimension_numbers = #tpu.dot_dimension_numbers<[1], [0], [0], [1], [0, 0, 1, 1], [], []>} : vector<168x8xbf16>, vector<8x16xbf16>, vector<168x16xf32> -> vector<168x16xf32>
    %c16_i32_40 = arith.constant 16 : i32
    %76 = arith.addi %0, %c16_i32_40 : i32
    %77 = tpu.assume_multiple %76, 8 : i32
    %c0_41 = arith.constant 0 : index
    %78 = arith.index_cast %77 : i32 to index
    %c0_42 = arith.constant 0 : index
    %79 = vector.load %arg3[%c0_41, %78, %c0_42] : memref<1x200x8xbf16, #tpu.memory_space<vmem>>, vector<1x168x8xbf16>
    %80 = vector.shape_cast %79 : vector<1x168x8xbf16> to vector<168x8xbf16>
    %81 = arith.extf %80 : vector<168x8xbf16> to vector<168x8xf32>
    %c0_43 = arith.constant 0 : index
    %c0_44 = arith.constant 0 : index
    %82 = vector.load %arg6[%c0_43, %c0_44] : memref<1x8xf32, #tpu.memory_space<vmem>>, vector<1x8xf32>
    %83 = vector.broadcast %82 : vector<1x8xf32> to vector<168x8xf32>
    %84 = arith.mulf %81, %83 : vector<168x8xf32>
    %c0_45 = arith.constant 0 : index
    %c0_46 = arith.constant 0 : index
    %85 = vector.load %arg7[%c0_45, %c0_46] : memref<1x8xf32, #tpu.memory_space<vmem>>, vector<1x8xf32>
    %86 = vector.broadcast %85 : vector<1x8xf32> to vector<168x8xf32>
    %87 = arith.addf %84, %86 : vector<168x8xf32>
    %cst_47 = arith.constant 0.000000e+00 : f32
    %88 = vector.broadcast %cst_47 : f32 to vector<168x8xf32>
    %89 = arith.maximumf %87, %88 : vector<168x8xf32>
    %90 = arith.truncf %89 : vector<168x8xf32> to vector<168x8xbf16>
    %c4 = arith.constant 4 : index
    %c0_48 = arith.constant 0 : index
    %c0_49 = arith.constant 0 : index
    %91 = vector.load %arg4[%c4, %c0_48, %c0_49] : memref<9x8x16xbf16, #tpu.memory_space<vmem>>, vector<1x8x16xbf16>
    %92 = vector.shape_cast %91 : vector<1x8x16xbf16> to vector<8x16xbf16>
    %cst_50 = arith.constant dense<0.000000e+00> : vector<168x16xf32>
    %93 = tpu.matmul %90, %92, %cst_50 {dimension_numbers = #tpu.dot_dimension_numbers<[1], [0], [0], [1], [0, 0, 1, 1], [], []>} : vector<168x8xbf16>, vector<8x16xbf16>, vector<168x16xf32> -> vector<168x16xf32>
    %94 = arith.addf %75, %93 : vector<168x16xf32>
    %c32_i32_51 = arith.constant 32 : i32
    %95 = arith.addi %0, %c32_i32_51 : i32
    %96 = tpu.assume_multiple %95, 8 : i32
    %c0_52 = arith.constant 0 : index
    %97 = arith.index_cast %96 : i32 to index
    %c0_53 = arith.constant 0 : index
    %98 = vector.load %arg3[%c0_52, %97, %c0_53] : memref<1x200x8xbf16, #tpu.memory_space<vmem>>, vector<1x168x8xbf16>
    %99 = vector.shape_cast %98 : vector<1x168x8xbf16> to vector<168x8xbf16>
    %100 = arith.extf %99 : vector<168x8xbf16> to vector<168x8xf32>
    %c0_54 = arith.constant 0 : index
    %c0_55 = arith.constant 0 : index
    %101 = vector.load %arg6[%c0_54, %c0_55] : memref<1x8xf32, #tpu.memory_space<vmem>>, vector<1x8xf32>
    %102 = vector.broadcast %101 : vector<1x8xf32> to vector<168x8xf32>
    %103 = arith.mulf %100, %102 : vector<168x8xf32>
    %c0_56 = arith.constant 0 : index
    %c0_57 = arith.constant 0 : index
    %104 = vector.load %arg7[%c0_56, %c0_57] : memref<1x8xf32, #tpu.memory_space<vmem>>, vector<1x8xf32>
    %105 = vector.broadcast %104 : vector<1x8xf32> to vector<168x8xf32>
    %106 = arith.addf %103, %105 : vector<168x8xf32>
    %cst_58 = arith.constant 0.000000e+00 : f32
    %107 = vector.broadcast %cst_58 : f32 to vector<168x8xf32>
    %108 = arith.maximumf %106, %107 : vector<168x8xf32>
    %109 = arith.truncf %108 : vector<168x8xf32> to vector<168x8xbf16>
    %c7 = arith.constant 7 : index
    %c0_59 = arith.constant 0 : index
    %c0_60 = arith.constant 0 : index
    %110 = vector.load %arg4[%c7, %c0_59, %c0_60] : memref<9x8x16xbf16, #tpu.memory_space<vmem>>, vector<1x8x16xbf16>
    %111 = vector.shape_cast %110 : vector<1x8x16xbf16> to vector<8x16xbf16>
    %cst_61 = arith.constant dense<0.000000e+00> : vector<168x16xf32>
    %112 = tpu.matmul %109, %111, %cst_61 {dimension_numbers = #tpu.dot_dimension_numbers<[1], [0], [0], [1], [0, 0, 1, 1], [], []>} : vector<168x8xbf16>, vector<8x16xbf16>, vector<168x16xf32> -> vector<168x16xf32>
    %113 = arith.addf %94, %112 : vector<168x16xf32>
    %114 = vector.extract_strided_slice %113 {offsets = [1, 0], sizes = [160, 16], strides = [1, 1]} : vector<168x16xf32> to vector<160x16xf32>
    %115 = arith.addf %57, %114 : vector<160x16xf32>
    %c0_i32_62 = arith.constant 0 : i32
    %116 = arith.addi %0, %c0_i32_62 : i32
    %117 = tpu.assume_multiple %116, 8 : i32
    %c0_63 = arith.constant 0 : index
    %118 = arith.index_cast %117 : i32 to index
    %c0_64 = arith.constant 0 : index
    %119 = vector.load %arg3[%c0_63, %118, %c0_64] : memref<1x200x8xbf16, #tpu.memory_space<vmem>>, vector<1x168x8xbf16>
    %120 = vector.shape_cast %119 : vector<1x168x8xbf16> to vector<168x8xbf16>
    %121 = arith.extf %120 : vector<168x8xbf16> to vector<168x8xf32>
    %c0_65 = arith.constant 0 : index
    %c0_66 = arith.constant 0 : index
    %122 = vector.load %arg6[%c0_65, %c0_66] : memref<1x8xf32, #tpu.memory_space<vmem>>, vector<1x8xf32>
    %123 = vector.broadcast %122 : vector<1x8xf32> to vector<168x8xf32>
    %124 = arith.mulf %121, %123 : vector<168x8xf32>
    %c0_67 = arith.constant 0 : index
    %c0_68 = arith.constant 0 : index
    %125 = vector.load %arg7[%c0_67, %c0_68] : memref<1x8xf32, #tpu.memory_space<vmem>>, vector<1x8xf32>
    %126 = vector.broadcast %125 : vector<1x8xf32> to vector<168x8xf32>
    %127 = arith.addf %124, %126 : vector<168x8xf32>
    %cst_69 = arith.constant 0.000000e+00 : f32
    %128 = vector.broadcast %cst_69 : f32 to vector<168x8xf32>
    %129 = arith.maximumf %127, %128 : vector<168x8xf32>
    %130 = arith.truncf %129 : vector<168x8xf32> to vector<168x8xbf16>
    %c2 = arith.constant 2 : index
    %c0_70 = arith.constant 0 : index
    %c0_71 = arith.constant 0 : index
    %131 = vector.load %arg4[%c2, %c0_70, %c0_71] : memref<9x8x16xbf16, #tpu.memory_space<vmem>>, vector<1x8x16xbf16>
    %132 = vector.shape_cast %131 : vector<1x8x16xbf16> to vector<8x16xbf16>
    %cst_72 = arith.constant dense<0.000000e+00> : vector<168x16xf32>
    %133 = tpu.matmul %130, %132, %cst_72 {dimension_numbers = #tpu.dot_dimension_numbers<[1], [0], [0], [1], [0, 0, 1, 1], [], []>} : vector<168x8xbf16>, vector<8x16xbf16>, vector<168x16xf32> -> vector<168x16xf32>
    %c16_i32_73 = arith.constant 16 : i32
    %134 = arith.addi %0, %c16_i32_73 : i32
    %135 = tpu.assume_multiple %134, 8 : i32
    %c0_74 = arith.constant 0 : index
    %136 = arith.index_cast %135 : i32 to index
    %c0_75 = arith.constant 0 : index
    %137 = vector.load %arg3[%c0_74, %136, %c0_75] : memref<1x200x8xbf16, #tpu.memory_space<vmem>>, vector<1x168x8xbf16>
    %138 = vector.shape_cast %137 : vector<1x168x8xbf16> to vector<168x8xbf16>
    %139 = arith.extf %138 : vector<168x8xbf16> to vector<168x8xf32>
    %c0_76 = arith.constant 0 : index
    %c0_77 = arith.constant 0 : index
    %140 = vector.load %arg6[%c0_76, %c0_77] : memref<1x8xf32, #tpu.memory_space<vmem>>, vector<1x8xf32>
    %141 = vector.broadcast %140 : vector<1x8xf32> to vector<168x8xf32>
    %142 = arith.mulf %139, %141 : vector<168x8xf32>
    %c0_78 = arith.constant 0 : index
    %c0_79 = arith.constant 0 : index
    %143 = vector.load %arg7[%c0_78, %c0_79] : memref<1x8xf32, #tpu.memory_space<vmem>>, vector<1x8xf32>
    %144 = vector.broadcast %143 : vector<1x8xf32> to vector<168x8xf32>
    %145 = arith.addf %142, %144 : vector<168x8xf32>
    %cst_80 = arith.constant 0.000000e+00 : f32
    %146 = vector.broadcast %cst_80 : f32 to vector<168x8xf32>
    %147 = arith.maximumf %145, %146 : vector<168x8xf32>
    %148 = arith.truncf %147 : vector<168x8xf32> to vector<168x8xbf16>
    %c5 = arith.constant 5 : index
    %c0_81 = arith.constant 0 : index
    %c0_82 = arith.constant 0 : index
    %149 = vector.load %arg4[%c5, %c0_81, %c0_82] : memref<9x8x16xbf16, #tpu.memory_space<vmem>>, vector<1x8x16xbf16>
    %150 = vector.shape_cast %149 : vector<1x8x16xbf16> to vector<8x16xbf16>
    %cst_83 = arith.constant dense<0.000000e+00> : vector<168x16xf32>
    %151 = tpu.matmul %148, %150, %cst_83 {dimension_numbers = #tpu.dot_dimension_numbers<[1], [0], [0], [1], [0, 0, 1, 1], [], []>} : vector<168x8xbf16>, vector<8x16xbf16>, vector<168x16xf32> -> vector<168x16xf32>
    %152 = arith.addf %133, %151 : vector<168x16xf32>
    %c32_i32_84 = arith.constant 32 : i32
    %153 = arith.addi %0, %c32_i32_84 : i32
    %154 = tpu.assume_multiple %153, 8 : i32
    %c0_85 = arith.constant 0 : index
    %155 = arith.index_cast %154 : i32 to index
    %c0_86 = arith.constant 0 : index
    %156 = vector.load %arg3[%c0_85, %155, %c0_86] : memref<1x200x8xbf16, #tpu.memory_space<vmem>>, vector<1x168x8xbf16>
    %157 = vector.shape_cast %156 : vector<1x168x8xbf16> to vector<168x8xbf16>
    %158 = arith.extf %157 : vector<168x8xbf16> to vector<168x8xf32>
    %c0_87 = arith.constant 0 : index
    %c0_88 = arith.constant 0 : index
    %159 = vector.load %arg6[%c0_87, %c0_88] : memref<1x8xf32, #tpu.memory_space<vmem>>, vector<1x8xf32>
    %160 = vector.broadcast %159 : vector<1x8xf32> to vector<168x8xf32>
    %161 = arith.mulf %158, %160 : vector<168x8xf32>
    %c0_89 = arith.constant 0 : index
    %c0_90 = arith.constant 0 : index
    %162 = vector.load %arg7[%c0_89, %c0_90] : memref<1x8xf32, #tpu.memory_space<vmem>>, vector<1x8xf32>
    %163 = vector.broadcast %162 : vector<1x8xf32> to vector<168x8xf32>
    %164 = arith.addf %161, %163 : vector<168x8xf32>
    %cst_91 = arith.constant 0.000000e+00 : f32
    %165 = vector.broadcast %cst_91 : f32 to vector<168x8xf32>
    %166 = arith.maximumf %164, %165 : vector<168x8xf32>
    %167 = arith.truncf %166 : vector<168x8xf32> to vector<168x8xbf16>
    %c8 = arith.constant 8 : index
    %c0_92 = arith.constant 0 : index
    %c0_93 = arith.constant 0 : index
    %168 = vector.load %arg4[%c8, %c0_92, %c0_93] : memref<9x8x16xbf16, #tpu.memory_space<vmem>>, vector<1x8x16xbf16>
    %169 = vector.shape_cast %168 : vector<1x8x16xbf16> to vector<8x16xbf16>
    %cst_94 = arith.constant dense<0.000000e+00> : vector<168x16xf32>
    %170 = tpu.matmul %167, %169, %cst_94 {dimension_numbers = #tpu.dot_dimension_numbers<[1], [0], [0], [1], [0, 0, 1, 1], [], []>} : vector<168x8xbf16>, vector<8x16xbf16>, vector<168x16xf32> -> vector<168x16xf32>
    %171 = arith.addf %152, %170 : vector<168x16xf32>
    %172 = vector.extract_strided_slice %171 {offsets = [2, 0], sizes = [160, 16], strides = [1, 1]} : vector<168x16xf32> to vector<160x16xf32>
    %173 = arith.addf %115, %172 : vector<160x16xf32>
    %c0_95 = arith.constant 0 : index
    %c0_96 = arith.constant 0 : index
    %174 = vector.load %arg5[%c0_95, %c0_96] : memref<1x16xf32, #tpu.memory_space<vmem>>, vector<1x16xf32>
    %175 = vector.broadcast %174 : vector<1x16xf32> to vector<160x16xf32>
    %176 = arith.addf %173, %175 : vector<160x16xf32>
    %c0_97 = arith.constant 0 : index
    %c0_98 = arith.constant 0 : index
    %c0_99 = arith.constant 0 : index
    %177 = vector.load %arg8[%c0_97, %c0_98, %c0_99] : memref<1x160x16xf32, #tpu.memory_space<vmem>>, vector<1x160x16xf32>
    %178 = vector.shape_cast %177 : vector<1x160x16xf32> to vector<160x16xf32>
    %179 = vector.shape_cast %176 : vector<160x16xf32> to vector<1x160x16xf32>
    tpu.vector_store %arg8[%c0_97, %c0_98, %c0_99], %179 {strides = array<i32>} : memref<1x160x16xf32, #tpu.memory_space<vmem>>, vector<1x160x16xf32>,
    return
  }
  func.func @transform_0(%arg0: i32, %arg1: i32, %arg2: i32) -> (i32, i32, i32) {
    %c0_i32 = arith.constant 0 : i32
    %c0_i32_0 = arith.constant 0 : i32
    %c0_i32_1 = arith.constant 0 : i32
    return %arg0, %c0_i32, %c0_i32_0 : i32, i32, i32
  }
  func.func @transform_1(%arg0: i32, %arg1: i32, %arg2: i32) -> (i32, i32, i32) {
    %c0_i32 = arith.constant 0 : i32
    %c0_i32_0 = arith.constant 0 : i32
    %c0_i32_1 = arith.constant 0 : i32
    return %c0_i32, %c0_i32_0, %arg1 : i32, i32, i32
  }
  func.func @transform_2(%arg0: i32, %arg1: i32, %arg2: i32) -> (i32, i32) {
    %c0_i32 = arith.constant 0 : i32
    %c0_i32_0 = arith.constant 0 : i32
    return %c0_i32, %arg1 : i32, i32
  }
  func.func @transform_3(%arg0: i32, %arg1: i32, %arg2: i32) -> (i32, i32) {
    %c0_i32 = arith.constant 0 : i32
    %c0_i32_0 = arith.constant 0 : i32
    %c0_i32_1 = arith.constant 0 : i32
    return %c0_i32, %c0_i32_0 : i32, i32
  }
  func.func @transform_4(%arg0: i32, %arg1: i32, %arg2: i32) -> (i32, i32) {
    %c0_i32 = arith.constant 0 : i32
    %c0_i32_0 = arith.constant 0 : i32
    %c0_i32_1 = arith.constant 0 : i32
    return %c0_i32, %c0_i32_0 : i32, i32
  }
  func.func @transform_5(%arg0: i32, %arg1: i32, %arg2: i32) -> (i32, i32, i32) {
    %c0_i32 = arith.constant 0 : i32
    return %arg0, %arg2, %arg1 : i32, i32, i32
  }
}

</mosaic_0001>

<llo_original>
// kernel: tpu_custom_call.1
$region0: #{tpu_custom_call.1}
  #allocation0 [shape = 'u32[]', space=smem, size = 0x4, offset = 0x4, fixed_abs, tag = 'smem constant byte address 0x4 - core index']
  #allocation1 [shape = 'u32[144,128]{1,0:T(1,128)}', space=vmem, size = 0x12000, scoped, tag = 'internal scratch']
  %s0 = inlined_call_operand.vmem [shape: bf16[1,200,8], index: 0, kind: input, shape index: {}]
  %s1 = inlined_call_operand.vmem [shape: bf16[9,8,16], index: 1, kind: input, shape index: {}]
  %s2 = inlined_call_operand.vmem [shape: f32[1,16], index: 2, kind: input, shape index: {}]
  %s3 = inlined_call_operand.vmem [shape: f32[1,8], index: 3, kind: input, shape index: {}]
  %s4 = inlined_call_operand.vmem [shape: f32[1,8], index: 4, kind: input, shape index: {}]
  %s5 = inlined_call_operand.vmem [shape: f32[1,160,16], index: 5, kind: output, shape index: {}]
  %s6 = sld [smem:[#allocation0]]
  $region30: #{tpu_custom_call.1} parent=0
    _
  %s8 = ssub.s32 1, %s6
  %s9 = scalar_select 0, %s8, %s6
  // Predicated region
  $region2: #{tpu_custom_call.1} parent=0 // pred_check
    _
  $region3: #{tpu_custom_call.1} parent=0 // pred_check_branch
    %11 = sbr.rel (0) target = $region5
  $region4: #{tpu_custom_call.1} parent=0 // pred_region
    _
  $region5: #{tpu_custom_call.1} parent=0 // pred_fallthru
    _
  // Predicated region
  $region6: #{tpu_custom_call.1} parent=0 // pred_check
    _
  $region7: #{tpu_custom_call.1} parent=0 // pred_check_branch
    %13 = sbr.rel (0) target = $region9
  $region8: #{tpu_custom_call.1} parent=0 // pred_region
    _
  $region9: #{tpu_custom_call.1} parent=0 // pred_fallthru
    _
  // Predicated region
  $region10: #{tpu_custom_call.1} parent=0 // pred_check
    _
  $region11: #{tpu_custom_call.1} parent=0 // pred_check_branch
    %15 = sbr.rel (0) target = $region13
  $region12: #{tpu_custom_call.1} parent=0 // pred_region
    _
  $region13: #{tpu_custom_call.1} parent=0 // pred_fallthru
    _
  // Predicated region
  $region14: #{tpu_custom_call.1} parent=0 // pred_check
    _
  $region15: #{tpu_custom_call.1} parent=0 // pred_check_branch
    %17 = sbr.rel (0) target = $region17
  $region16: #{tpu_custom_call.1} parent=0 // pred_region
    _
  $region17: #{tpu_custom_call.1} parent=0 // pred_fallthru
    _
  // Predicated region
  $region18: #{tpu_custom_call.1} parent=0 // pred_check
    _
  $region19: #{tpu_custom_call.1} parent=0 // pred_check_branch
    %19 = sbr.rel (0) target = $region21
  $region20: #{tpu_custom_call.1} parent=0 // pred_region
    _
  $region21: #{tpu_custom_call.1} parent=0 // pred_fallthru
    _
  %s21 = smul.u32 0, 160
  %s22 = sshra.s32 %s21, 3
  %s23 = sand.u32 %s21, 7
  %s24 = smul.addr %s22, 4
  %s25 = scalar_lea.vmem %s0, %s24
  %v26 = vld [vmem:[%s25] sm:$0xf]
  %v27 = vld [vmem:[%s25 + $0x4] sm:$0xf]
  %v28 = vld [vmem:[%s25 + $0x8] sm:$0xf]
  %v29 = vld [vmem:[%s25 + $0xc] sm:$0xf]
  %v30 = vld [vmem:[%s25 + $0x10] sm:$0xf]
  %v31 = vld [vmem:[%s25 + $0x14] sm:$0xf]
  %v32 = vld [vmem:[%s25 + $0x18] sm:$0xf]
  %v33 = vld [vmem:[%s25 + $0x1c] sm:$0xf]
  %v34 = vld [vmem:[%s25 + $0x20] sm:$0xf]
  %v35 = vld [vmem:[%s25 + $0x24] sm:$0xf]
  %v36 = vld [vmem:[%s25 + $0x28] sm:$0xf]
  %v37 = vld [vmem:[%s25 + $0x2c] sm:$0xf]
  %v38 = vld [vmem:[%s25 + $0x30] sm:$0xf]
  %v39 = vld [vmem:[%s25 + $0x34] sm:$0xf]
  %v40 = vld [vmem:[%s25 + $0x38] sm:$0xf]
  %v41 = vld [vmem:[%s25 + $0x3c] sm:$0xf]
  %v42 = vld [vmem:[%s25 + $0x40] sm:$0xf]
  %v43 = vld [vmem:[%s25 + $0x44] sm:$0xf]
  %v44 = vld [vmem:[%s25 + $0x48] sm:$0xf]
  %v45 = vld [vmem:[%s25 + $0x4c] sm:$0xf]
  %v46 = vld [vmem:[%s25 + $0x50] sm:$0xf]
  %v47 = vunpack.c.l.bf16 %v26
  %v48 = vunpack.c.l.bf16 %v27
  %v49 = vunpack.c.l.bf16 %v28
  %v50 = vunpack.c.l.bf16 %v29
  %v51 = vunpack.c.l.bf16 %v30
  %v52 = vunpack.c.l.bf16 %v31
  %v53 = vunpack.c.l.bf16 %v32
  %v54 = vunpack.c.l.bf16 %v33
  %v55 = vunpack.c.l.bf16 %v34
  %v56 = vunpack.c.l.bf16 %v35
  %v57 = vunpack.c.l.bf16 %v36
  %v58 = vunpack.c.l.bf16 %v37
  %v59 = vunpack.c.l.bf16 %v38
  %v60 = vunpack.c.l.bf16 %v39
  %v61 = vunpack.c.l.bf16 %v40
  %v62 = vunpack.c.l.bf16 %v41
  %v63 = vunpack.c.l.bf16 %v42
  %v64 = vunpack.c.l.bf16 %v43
  %v65 = vunpack.c.l.bf16 %v44
  %v66 = vunpack.c.l.bf16 %v45
  %v67 = vunpack.c.l.bf16 %v46
  %v68 = vld [vmem:[%s3] sm:$0x1]
  %v70 = vlaneseq
  %v71 = vshrl.u32 %v70, 7
  %v72 = vsub.s32 0, %v71
  %v73 = vrot.slane %v68, %v72
  %v75 = vmul.f32 %v47, %v73
  %v76 = vmul.f32 %v48, %v73
  %v77 = vmul.f32 %v49, %v73
  %v78 = vmul.f32 %v50, %v73
  %v79 = vmul.f32 %v51, %v73
  %v80 = vmul.f32 %v52, %v73
  %v81 = vmul.f32 %v53, %v73
  %v82 = vmul.f32 %v54, %v73
  %v83 = vmul.f32 %v55, %v73
  %v84 = vmul.f32 %v56, %v73
  %v85 = vmul.f32 %v57, %v73
  %v86 = vmul.f32 %v58, %v73
  %v87 = vmul.f32 %v59, %v73
  %v88 = vmul.f32 %v60, %v73
  %v89 = vmul.f32 %v61, %v73
  %v90 = vmul.f32 %v62, %v73
  %v91 = vmul.f32 %v63, %v73
  %v92 = vmul.f32 %v64, %v73
  %v93 = vmul.f32 %v65, %v73
  %v94 = vmul.f32 %v66, %v73
  %v95 = vmul.f32 %v67, %v73
  %v96 = vld [vmem:[%s4] sm:$0x1]
  %v98 = vlaneseq
  %v99 = vshrl.u32 %v98, 7
  %v100 = vsub.s32 0, %v99
  %v101 = vrot.slane %v96, %v100
  %v103 = vadd.f32 %v75, %v101
  %v104 = vadd.f32 %v76, %v101
  %v105 = vadd.f32 %v77, %v101
  %v106 = vadd.f32 %v78, %v101
  %v107 = vadd.f32 %v79, %v101
  %v108 = vadd.f32 %v80, %v101
  %v109 = vadd.f32 %v81, %v101
  %v110 = vadd.f32 %v82, %v101
  %v111 = vadd.f32 %v83, %v101
  %v112 = vadd.f32 %v84, %v101
  %v113 = vadd.f32 %v85, %v101
  %v114 = vadd.f32 %v86, %v101
  %v115 = vadd.f32 %v87, %v101
  %v116 = vadd.f32 %v88, %v101
  %v117 = vadd.f32 %v89, %v101
  %v118 = vadd.f32 %v90, %v101
  %v119 = vadd.f32 %v91, %v101
  %v120 = vadd.f32 %v92, %v101
  %v121 = vadd.f32 %v93, %v101
  %v122 = vadd.f32 %v94, %v101
  %v123 = vadd.f32 %v95, %v101
  %v124 = vmax.f32 %v103, 0.0
  %v125 = vmax.f32 %v104, 0.0
  %v126 = vmax.f32 %v105, 0.0
  %v127 = vmax.f32 %v106, 0.0
  %v128 = vmax.f32 %v107, 0.0
  %v129 = vmax.f32 %v108, 0.0
  %v130 = vmax.f32 %v109, 0.0
  %v131 = vmax.f32 %v110, 0.0
  %v132 = vmax.f32 %v111, 0.0
  %v133 = vmax.f32 %v112, 0.0
  %v134 = vmax.f32 %v113, 0.0
  %v135 = vmax.f32 %v114, 0.0
  %v136 = vmax.f32 %v115, 0.0
  %v137 = vmax.f32 %v116, 0.0
  %v138 = vmax.f32 %v117, 0.0
  %v139 = vmax.f32 %v118, 0.0
  %v140 = vmax.f32 %v119, 0.0
  %v141 = vmax.f32 %v120, 0.0
  %v142 = vmax.f32 %v121, 0.0
  %v143 = vmax.f32 %v122, 0.0
  %v144 = vmax.f32 %v123, 0.0
  %v145 = vpack.c.bf16 %v125, %v124
  %v146 = vpack.c.bf16 %v127, %v126
  %v147 = vpack.c.bf16 %v129, %v128
  %v148 = vpack.c.bf16 %v131, %v130
  %v149 = vpack.c.bf16 %v133, %v132
  %v150 = vpack.c.bf16 %v135, %v134
  %v151 = vpack.c.bf16 %v137, %v136
  %v152 = vpack.c.bf16 %v139, %v138
  %v153 = vpack.c.bf16 %v141, %v140
  %v154 = vpack.c.bf16 %v143, %v142
  %v155 = vpack.c.bf16 %v144, %v144
  %v156 = vld [vmem:[%s1] sm:$0xf]
  %s157 = sadd.s32 %s21, 16
  %s158 = sshra.s32 %s157, 3
  %s159 = sand.u32 %s157, 7
  %s160 = smul.addr %s158, 4
  %s161 = scalar_lea.vmem %s0, %s160
  %v162 = vld [vmem:[%s161] sm:$0xf]
  %v163 = vld [vmem:[%s161 + $0x4] sm:$0xf]
  %v164 = vld [vmem:[%s161 + $0x8] sm:$0xf]
  %v165 = vld [vmem:[%s161 + $0xc] sm:$0xf]
  %v166 = vld [vmem:[%s161 + $0x10] sm:$0xf]
  %v167 = vld [vmem:[%s161 + $0x14] sm:$0xf]
  %v168 = vld [vmem:[%s161 + $0x18] sm:$0xf]
  %v169 = vld [vmem:[%s161 + $0x1c] sm:$0xf]
  %v170 = vld [vmem:[%s161 + $0x20] sm:$0xf]
  %v171 = vld [vmem:[%s161 + $0x24] sm:$0xf]
  %v172 = vld [vmem:[%s161 + $0x28] sm:$0xf]
  %v173 = vld [vmem:[%s161 + $0x2c] sm:$0xf]
  %v174 = vld [vmem:[%s161 + $0x30] sm:$0xf]
  %v175 = vld [vmem:[%s161 + $0x34] sm:$0xf]
  %v176 = vld [vmem:[%s161 + $0x38] sm:$0xf]
  %v177 = vld [vmem:[%s161 + $0x3c] sm:$0xf]
  %v178 = vld [vmem:[%s161 + $0x40] sm:$0xf]
  %v179 = vld [vmem:[%s161 + $0x44] sm:$0xf]
  %v180 = vld [vmem:[%s161 + $0x48] sm:$0xf]
  %v181 = vld [vmem:[%s161 + $0x4c] sm:$0xf]
  %v182 = vld [vmem:[%s161 + $0x50] sm:$0xf]
  %v183 = vunpack.c.l.bf16 %v162
  %v184 = vunpack.c.l.bf16 %v163
  %v185 = vunpack.c.l.bf16 %v164
  %v186 = vunpack.c.l.bf16 %v165
  %v187 = vunpack.c.l.bf16 %v166
  %v188 = vunpack.c.l.bf16 %v167
  %v189 = vunpack.c.l.bf16 %v168
  %v190 = vunpack.c.l.bf16 %v169
  %v191 = vunpack.c.l.bf16 %v170
  %v192 = vunpack.c.l.bf16 %v171
  %v193 = vunpack.c.l.bf16 %v172
  %v194 = vunpack.c.l.bf16 %v173
  %v195 = vunpack.c.l.bf16 %v174
  %v196 = vunpack.c.l.bf16 %v175
  %v197 = vunpack.c.l.bf16 %v176
  %v198 = vunpack.c.l.bf16 %v177
  %v199 = vunpack.c.l.bf16 %v178
  %v200 = vunpack.c.l.bf16 %v179
  %v201 = vunpack.c.l.bf16 %v180
  %v202 = vunpack.c.l.bf16 %v181
  %v203 = vunpack.c.l.bf16 %v182
  %v204 = vmul.f32 %v183, %v73
  %v205 = vmul.f32 %v184, %v73
  %v206 = vmul.f32 %v185, %v73
  %v207 = vmul.f32 %v186, %v73
  %v208 = vmul.f32 %v187, %v73
  %v209 = vmul.f32 %v188, %v73
  %v210 = vmul.f32 %v189, %v73
  %v211 = vmul.f32 %v190, %v73
  %v212 = vmul.f32 %v191, %v73
  %v213 = vmul.f32 %v192, %v73
  %v214 = vmul.f32 %v193, %v73
  %v215 = vmul.f32 %v194, %v73
  %v216 = vmul.f32 %v195, %v73
  %v217 = vmul.f32 %v196, %v73
  %v218 = vmul.f32 %v197, %v73
  %v219 = vmul.f32 %v198, %v73
  %v220 = vmul.f32 %v199, %v73
  %v221 = vmul.f32 %v200, %v73
  %v222 = vmul.f32 %v201, %v73
  %v223 = vmul.f32 %v202, %v73
  %v224 = vmul.f32 %v203, %v73
  %v225 = vadd.f32 %v204, %v101
  %v226 = vadd.f32 %v205, %v101
  %v227 = vadd.f32 %v206, %v101
  %v228 = vadd.f32 %v207, %v101
  %v229 = vadd.f32 %v208, %v101
  %v230 = vadd.f32 %v209, %v101
  %v231 = vadd.f32 %v210, %v101
  %v232 = vadd.f32 %v211, %v101
  %v233 = vadd.f32 %v212, %v101
  %v234 = vadd.f32 %v213, %v101
  %v235 = vadd.f32 %v214, %v101
  %v236 = vadd.f32 %v215, %v101
  %v237 = vadd.f32 %v216, %v101
  %v238 = vadd.f32 %v217, %v101
  %v239 = vadd.f32 %v218, %v101
  %v240 = vadd.f32 %v219, %v101
  %v241 = vadd.f32 %v220, %v101
  %v242 = vadd.f32 %v221, %v101
  %v243 = vadd.f32 %v222, %v101
  %v244 = vadd.f32 %v223, %v101
  %v245 = vadd.f32 %v224, %v101
  %v246 = vmax.f32 %v225, 0.0
  %v247 = vmax.f32 %v226, 0.0
  %v248 = vmax.f32 %v227, 0.0
  %v249 = vmax.f32 %v228, 0.0
  %v250 = vmax.f32 %v229, 0.0
  %v251 = vmax.f32 %v230, 0.0
  %v252 = vmax.f32 %v231, 0.0
  %v253 = vmax.f32 %v232, 0.0
  %v254 = vmax.f32 %v233, 0.0
  %v255 = vmax.f32 %v234, 0.0
  %v256 = vmax.f32 %v235, 0.0
  %v257 = vmax.f32 %v236, 0.0
  %v258 = vmax.f32 %v237, 0.0
  %v259 = vmax.f32 %v238, 0.0
  %v260 = vmax.f32 %v239, 0.0
  %v261 = vmax.f32 %v240, 0.0
  %v262 = vmax.f32 %v241, 0.0
  %v263 = vmax.f32 %v242, 0.0
  %v264 = vmax.f32 %v243, 0.0
  %v265 = vmax.f32 %v244, 0.0
  %v266 = vmax.f32 %v245, 0.0
  %v267 = vpack.c.bf16 %v247, %v246
  %v268 = vpack.c.bf16 %v249, %v248
  %v269 = vpack.c.bf16 %v251, %v250
  %v270 = vpack.c.bf16 %v253, %v252
  %v271 = vpack.c.bf16 %v255, %v254
  %v272 = vpack.c.bf16 %v257, %v256
  %v273 = vpack.c.bf16 %v259, %v258
  %v274 = vpack.c.bf16 %v261, %v260
  %v275 = vpack.c.bf16 %v263, %v262
  %v276 = vpack.c.bf16 %v265, %v264
  %v277 = vpack.c.bf16 %v266, %v266
  %s278 = scalar_lea.vmem %s1, 12
  %v279 = vld [vmem:[%s278] sm:$0xf]
  %vm280 = vcmask 64512
  %v282 = vsel %vm280, %v267, 0
  %v285 = vsel %vm280, %v268, 0
  %v288 = vsel %vm280, %v269, 0
  %v291 = vsel %vm280, %v270, 0
  %v294 = vsel %vm280, %v271, 0
  %v297 = vsel %vm280, %v272, 0
  %v300 = vsel %vm280, %v273, 0
  %v303 = vsel %vm280, %v274, 0
  %v306 = vsel %vm280, %v275, 0
  %v309 = vsel %vm280, %v276, 0
  %v312 = vsel %vm280, %v277, 0
  %vm314 = vcmask 1043456
  %v316 = vsel %vm314, %v279, 0
  %318 = vmatprep.subr.bf16.mxu0 0
  %319 = vmatpush1.bf16.msra.mxu0 %v316
  %320 = vmatprep.subr.bf16.mxu0 0
  %321 = vmatpush1.bf16.msra.mxu0 0
  %322 = vmatprep.subr.bf16.mxu0 0
  %323 = vmatpush1.bf16.msra.mxu0 0
  %324 = vmatprep.subr.bf16.mxu0 0
  %325 = vmatpush1.bf16.msra.mxu0 0
  %326 = vmatprep.subr.bf16.mxu0 0
  %327 = vmatpush1.bf16.msra.mxu0 0
  %328 = vmatprep.subr.bf16.mxu0 0
  %329 = vmatpush1.bf16.msra.mxu0 0
  %330 = vmatprep.subr.bf16.mxu0 0
  %331 = vmatpush1.bf16.msra.mxu0 0
  %332 = vmatprep.subr.bf16.mxu0 0
  %333 = vmatpush1.bf16.msra.mxu0 0
  %334 = vmatprep.subr.bf16.mxu0 0
  %335 = vmatpush1.bf16.msra.mxu0 0
  %336 = vmatprep.subr.bf16.mxu0 0
  %337 = vmatpush1.bf16.msra.mxu0 0
  %338 = vmatprep.subr.bf16.mxu0 0
  %339 = vmatpush1.bf16.msra.mxu0 0
  %340 = vmatprep.subr.bf16.mxu0 0
  %341 = vmatpush1.bf16.msra.mxu0 0
  %342 = vmatprep.subr.bf16.mxu0 0
  %343 = vmatpush1.bf16.msra.mxu0 0
  %344 = vmatprep.subr.bf16.mxu0 0
  %345 = vmatpush1.bf16.msra.mxu0 0
  %346 = vmatprep.subr.bf16.mxu0 0
  %347 = vmatpush1.bf16.msra.mxu0 0
  %348 = vmatprep.subr.bf16.mxu0 0
  %349 = vmatpush1.bf16.msra.mxu0 0
  %350 = vmatprep.mubr.bf16.mxu0 0
  %351 = vmatmul.mubr.bf16.gmra.mrb[0].mxu0 %v282
  %v352 = vpop.f32.mrb[0].mxu0
  %v353 = vadd.f32 0.0, %v352
  %v354 = vpop.f32.mrb[0].mxu0
  %v355 = vpop.f32.mrb[0].mxu0
  %v356 = vadd.f32 0.0, %v355
  %v357 = vpop.f32.mrb[0].mxu0
  %358 = vmatprep.mubr.bf16.mxu0 0
  %359 = vmatmul.mubr.bf16.gmra.mrb[0].mxu0 %v285
  %v360 = vpop.f32.mrb[0].mxu0
  %v361 = vadd.f32 0.0, %v360
  %v362 = vpop.f32.mrb[0].mxu0
  %v363 = vpop.f32.mrb[0].mxu0
  %v364 = vadd.f32 0.0, %v363
  %v365 = vpop.f32.mrb[0].mxu0
  %366 = vmatprep.mubr.bf16.mxu0 0
  %367 = vmatmul.mubr.bf16.gmra.mrb[0].mxu0 %v288
  %v368 = vpop.f32.mrb[0].mxu0
  %v369 = vadd.f32 0.0, %v368
  %v370 = vpop.f32.mrb[0].mxu0
  %v371 = vpop.f32.mrb[0].mxu0
  %v372 = vadd.f32 0.0, %v371
  %v373 = vpop.f32.mrb[0].mxu0
  %374 = vmatprep.mubr.bf16.mxu0 0
  %375 = vmatmul.mubr.bf16.gmra.mrb[0].mxu0 %v291
  %v376 = vpop.f32.mrb[0].mxu0
  %v377 = vadd.f32 0.0, %v376
  %v378 = vpop.f32.mrb[0].mxu0
  %v379 = vpop.f32.mrb[0].mxu0
  %v380 = vadd.f32 0.0, %v379
  %v381 = vpop.f32.mrb[0].mxu0
  %382 = vmatprep.mubr.bf16.mxu0 0
  %383 = vmatmul.mubr.bf16.gmra.mrb[0].mxu0 %v294
  %v384 = vpop.f32.mrb[0].mxu0
  %v385 = vadd.f32 0.0, %v384
  %v386 = vpop.f32.mrb[0].mxu0
  %v387 = vpop.f32.mrb[0].mxu0
  %v388 = vadd.f32 0.0, %v387
  %v389 = vpop.f32.mrb[0].mxu0
  %390 = vmatprep.mubr.bf16.mxu0 0
  %391 = vmatmul.mubr.bf16.gmra.mrb[0].mxu0 %v297
  %v392 = vpop.f32.mrb[0].mxu0
  %v393 = vadd.f32 0.0, %v392
  %v394 = vpop.f32.mrb[0].mxu0
  %v395 = vpop.f32.mrb[0].mxu0
  %v396 = vadd.f32 0.0, %v395
  %v397 = vpop.f32.mrb[0].mxu0
  %398 = vmatprep.mubr.bf16.mxu0 0
  %399 = vmatmul.mubr.bf16.gmra.mrb[0].mxu0 %v300
  %v400 = vpop.f32.mrb[0].mxu0
  %v401 = vadd.f32 0.0, %v400
  %v402 = vpop.f32.mrb[0].mxu0
  %v403 = vpop.f32.mrb[0].mxu0
  %v404 = vadd.f32 0.0, %v403
  %v405 = vpop.f32.mrb[0].mxu0
  %406 = vmatprep.mubr.bf16.mxu0 0
  %407 = vmatmul.mubr.bf16.gmra.mrb[0].mxu0 %v303
  %v408 = vpop.f32.mrb[0].mxu0
  %v409 = vadd.f32 0.0, %v408
  %v410 = vpop.f32.mrb[0].mxu0
  %v411 = vpop.f32.mrb[0].mxu0
  %v412 = vadd.f32 0.0, %v411
  %v413 = vpop.f32.mrb[0].mxu0
  %414 = vmatprep.mubr.bf16.mxu0 0
  %415 = vmatmul.mubr.bf16.gmra.mrb[0].mxu0 %v306
  %v416 = vpop.f32.mrb[0].mxu0
  %v417 = vadd.f32 0.0, %v416
  %v418 = vpop.f32.mrb[0].mxu0
  %v419 = vpop.f32.mrb[0].mxu0
  %v420 = vadd.f32 0.0, %v419
  %v421 = vpop.f32.mrb[0].mxu0
  %422 = vmatprep.mubr.bf16.mxu0 0
  %423 = vmatmul.mubr.bf16.gmra.mrb[0].mxu0 %v309
  %v424 = vpop.f32.mrb[0].mxu0
  %v425 = vadd.f32 0.0, %v424
  %v426 = vpop.f32.mrb[0].mxu0
  %v427 = vpop.f32.mrb[0].mxu0
  %v428 = vadd.f32 0.0, %v427
  %v429 = vpop.f32.mrb[0].mxu0
  %430 = vmatprep.mubr.bf16.mxu0 0
  %431 = vmatmul.mubr.bf16.gmra.mrb[0].mxu0 %v312
  %v432 = vpop.f32.mrb[0].mxu0
  %v433 = vpop.f32.mrb[0].mxu0
  %v434 = vpop.f32.mrb[0].mxu0
  %v435 = vpop.f32.mrb[0].mxu0
  %436 = vdwg.mxu0
  %v438 = vsel %vm280, %v145, 0
  %v441 = vsel %vm280, %v146, 0
  %v444 = vsel %vm280, %v147, 0
  %v447 = vsel %vm280, %v148, 0
  %v450 = vsel %vm280, %v149, 0
  %v453 = vsel %vm280, %v150, 0
  %v456 = vsel %vm280, %v151, 0
  %v459 = vsel %vm280, %v152, 0
  %v462 = vsel %vm280, %v153, 0
  %v465 = vsel %vm280, %v154, 0
  %v468 = vsel %vm280, %v155, 0
  %v471 = vsel %vm314, %v156, 0
  %473 = vmatprep.subr.bf16.mxu0 0
  %474 = vmatpush1.bf16.msra.mxu0 %v471
  %475 = vmatprep.subr.bf16.mxu0 0
  %476 = vmatpush1.bf16.msra.mxu0 0
  %477 = vmatprep.subr.bf16.mxu0 0
  %478 = vmatpush1.bf16.msra.mxu0 0
  %479 = vmatprep.subr.bf16.mxu0 0
  %480 = vmatpush1.bf16.msra.mxu0 0
  %481 = vmatprep.subr.bf16.mxu0 0
  %482 = vmatpush1.bf16.msra.mxu0 0
  %483 = vmatprep.subr.bf16.mxu0 0
  %484 = vmatpush1.bf16.msra.mxu0 0
  %485 = vmatprep.subr.bf16.mxu0 0
  %486 = vmatpush1.bf16.msra.mxu0 0
  %487 = vmatprep.subr.bf16.mxu0 0
  %488 = vmatpush1.bf16.msra.mxu0 0
  %489 = vmatprep.subr.bf16.mxu0 0
  %490 = vmatpush1.bf16.msra.mxu0 0
  %491 = vmatprep.subr.bf16.mxu0 0
  %492 = vmatpush1.bf16.msra.mxu0 0
  %493 = vmatprep.subr.bf16.mxu0 0
  %494 = vmatpush1.bf16.msra.mxu0 0
  %495 = vmatprep.subr.bf16.mxu0 0
  %496 = vmatpush1.bf16.msra.mxu0 0
  %497 = vmatprep.subr.bf16.mxu0 0
  %498 = vmatpush1.bf16.msra.mxu0 0
  %499 = vmatprep.subr.bf16.mxu0 0
  %500 = vmatpush1.bf16.msra.mxu0 0
  %501 = vmatprep.subr.bf16.mxu0 0
  %502 = vmatpush1.bf16.msra.mxu0 0
  %503 = vmatprep.subr.bf16.mxu0 0
  %504 = vmatpush1.bf16.msra.mxu0 0
  %505 = vmatprep.mubr.bf16.mxu0 0
  %506 = vmatmul.mubr.bf16.gmra.mrb[0].mxu0 %v438
  %v507 = vpop.f32.mrb[0].mxu0
  %v508 = vadd.f32 %v353, %v507
  %v509 = vpop.f32.mrb[0].mxu0
  %v510 = vpop.f32.mrb[0].mxu0
  %v511 = vadd.f32 %v356, %v510
  %v512 = vpop.f32.mrb[0].mxu0
  %513 = vmatprep.mubr.bf16.mxu0 0
  %514 = vmatmul.mubr.bf16.gmra.mrb[0].mxu0 %v441
  %v515 = vpop.f32.mrb[0].mxu0
  %v516 = vadd.f32 %v361, %v515
  %v517 = vpop.f32.mrb[0].mxu0
  %v518 = vpop.f32.mrb[0].mxu0
  %v519 = vadd.f32 %v364, %v518
  %v520 = vpop.f32.mrb[0].mxu0
  %521 = vmatprep.mubr.bf16.mxu0 0
  %522 = vmatmul.mubr.bf16.gmra.mrb[0].mxu0 %v444
  %v523 = vpop.f32.mrb[0].mxu0
  %v524 = vadd.f32 %v369, %v523
  %v525 = vpop.f32.mrb[0].mxu0
  %v526 = vpop.f32.mrb[0].mxu0
  %v527 = vadd.f32 %v372, %v526
  %v528 = vpop.f32.mrb[0].mxu0
  %529 = vmatprep.mubr.bf16.mxu0 0
  %530 = vmatmul.mubr.bf16.gmra.mrb[0].mxu0 %v447
  %v531 = vpop.f32.mrb[0].mxu0
  %v532 = vadd.f32 %v377, %v531
  %v533 = vpop.f32.mrb[0].mxu0
  %v534 = vpop.f32.mrb[0].mxu0
  %v535 = vadd.f32 %v380, %v534
  %v536 = vpop.f32.mrb[0].mxu0
  %537 = vmatprep.mubr.bf16.mxu0 0
  %538 = vmatmul.mubr.bf16.gmra.mrb[0].mxu0 %v450
  %v539 = vpop.f32.mrb[0].mxu0
  %v540 = vadd.f32 %v385, %v539
  %v541 = vpop.f32.mrb[0].mxu0
  %v542 = vpop.f32.mrb[0].mxu0
  %v543 = vadd.f32 %v388, %v542
  %v544 = vpop.f32.mrb[0].mxu0
  %545 = vmatprep.mubr.bf16.mxu0 0
  %546 = vmatmul.mubr.bf16.gmra.mrb[0].mxu0 %v453
  %v547 = vpop.f32.mrb[0].mxu0
  %v548 = vadd.f32 %v393, %v547
  %v549 = vpop.f32.mrb[0].mxu0
  %v550 = vpop.f32.mrb[0].mxu0
  %v551 = vadd.f32 %v396, %v550
  %v552 = vpop.f32.mrb[0].mxu0
  %553 = vmatprep.mubr.bf16.mxu0 0
  %554 = vmatmul.mubr.bf16.gmra.mrb[0].mxu0 %v456
  %v555 = vpop.f32.mrb[0].mxu0
  %v556 = vadd.f32 %v401, %v555
  %v557 = vpop.f32.mrb[0].mxu0
  %v558 = vpop.f32.mrb[0].mxu0
  %v559 = vadd.f32 %v404, %v558
  %v560 = vpop.f32.mrb[0].mxu0
  %561 = vmatprep.mubr.bf16.mxu0 0
  %562 = vmatmul.mubr.bf16.gmra.mrb[0].mxu0 %v459
  %v563 = vpop.f32.mrb[0].mxu0
  %v564 = vadd.f32 %v409, %v563
  %v565 = vpop.f32.mrb[0].mxu0
  %v566 = vpop.f32.mrb[0].mxu0
  %v567 = vadd.f32 %v412, %v566
  %v568 = vpop.f32.mrb[0].mxu0
  %569 = vmatprep.mubr.bf16.mxu0 0
  %570 = vmatmul.mubr.bf16.gmra.mrb[0].mxu0 %v462
  %v571 = vpop.f32.mrb[0].mxu0
  %v572 = vadd.f32 %v417, %v571
  %v573 = vpop.f32.mrb[0].mxu0
  %v574 = vpop.f32.mrb[0].mxu0
  %v575 = vadd.f32 %v420, %v574
  %v576 = vpop.f32.mrb[0].mxu0
  %577 = vmatprep.mubr.bf16.mxu0 0
  %578 = vmatmul.mubr.bf16.gmra.mrb[0].mxu0 %v465
  %v579 = vpop.f32.mrb[0].mxu0
  %v580 = vadd.f32 %v425, %v579
  %v581 = vpop.f32.mrb[0].mxu0
  %v582 = vpop.f32.mrb[0].mxu0
  %v583 = vadd.f32 %v428, %v582
  %v584 = vpop.f32.mrb[0].mxu0
  %585 = vmatprep.mubr.bf16.mxu0 0
  %586 = vmatmul.mubr.bf16.gmra.mrb[0].mxu0 %v468
  %v587 = vpop.f32.mrb[0].mxu0
  %v588 = vpop.f32.mrb[0].mxu0
  %v589 = vpop.f32.mrb[0].mxu0
  %v590 = vpop.f32.mrb[0].mxu0
  %591 = vdwg.mxu0
  %s592 = sadd.s32 %s21, 32
  %s593 = sshra.s32 %s592, 3
  %s594 = sand.u32 %s592, 7
  %s595 = smul.addr %s593, 4
  %s596 = scalar_lea.vmem %s0, %s595
  %v597 = vld [vmem:[%s596] sm:$0xf]
  %v598 = vld [vmem:[%s596 + $0x4] sm:$0xf]
  %v599 = vld [vmem:[%s596 + $0x8] sm:$0xf]
  %v600 = vld [vmem:[%s596 + $0xc] sm:$0xf]
  %v601 = vld [vmem:[%s596 + $0x10] sm:$0xf]
  %v602 = vld [vmem:[%s596 + $0x14] sm:$0xf]
  %v603 = vld [vmem:[%s596 + $0x18] sm:$0xf]
  %v604 = vld [vmem:[%s596 + $0x1c] sm:$0xf]
  %v605 = vld [vmem:[%s596 + $0x20] sm:$0xf]
  %v606 = vld [vmem:[%s596 + $0x24] sm:$0xf]
  %v607 = vld [vmem:[%s596 + $0x28] sm:$0xf]
  %v608 = vld [vmem:[%s596 + $0x2c] sm:$0xf]
  %v609 = vld [vmem:[%s596 + $0x30] sm:$0xf]
  %v610 = vld [vmem:[%s596 + $0x34] sm:$0xf]
  %v611 = vld [vmem:[%s596 + $0x38] sm:$0xf]
  %v612 = vld [vmem:[%s596 + $0x3c] sm:$0xf]
  %v613 = vld [vmem:[%s596 + $0x40] sm:$0xf]
  %v614 = vld [vmem:[%s596 + $0x44] sm:$0xf]
  %v615 = vld [vmem:[%s596 + $0x48] sm:$0xf]
  %v616 = vld [vmem:[%s596 + $0x4c] sm:$0xf]
  %v617 = vld [vmem:[%s596 + $0x50] sm:$0xf]
  %v618 = vunpack.c.l.bf16 %v597
  %v619 = vunpack.c.l.bf16 %v598
  %v620 = vunpack.c.l.bf16 %v599
  %v621 = vunpack.c.l.bf16 %v600
  %v622 = vunpack.c.l.bf16 %v601
  %v623 = vunpack.c.l.bf16 %v602
  %v624 = vunpack.c.l.bf16 %v603
  %v625 = vunpack.c.l.bf16 %v604
  %v626 = vunpack.c.l.bf16 %v605
  %v627 = vunpack.c.l.bf16 %v606
  %v628 = vunpack.c.l.bf16 %v607
  %v629 = vunpack.c.l.bf16 %v608
  %v630 = vunpack.c.l.bf16 %v609
  %v631 = vunpack.c.l.bf16 %v610
  %v632 = vunpack.c.l.bf16 %v611
  %v633 = vunpack.c.l.bf16 %v612
  %v634 = vunpack.c.l.bf16 %v613
  %v635 = vunpack.c.l.bf16 %v614
  %v636 = vunpack.c.l.bf16 %v615
  %v637 = vunpack.c.l.bf16 %v616
  %v638 = vunpack.c.l.bf16 %v617
  %v639 = vmul.f32 %v618, %v73
  %v640 = vmul.f32 %v619, %v73
  %v641 = vmul.f32 %v620, %v73
  %v642 = vmul.f32 %v621, %v73
  %v643 = vmul.f32 %v622, %v73
  %v644 = vmul.f32 %v623, %v73
  %v645 = vmul.f32 %v624, %v73
  %v646 = vmul.f32 %v625, %v73
  %v647 = vmul.f32 %v626, %v73
  %v648 = vmul.f32 %v627, %v73
  %v649 = vmul.f32 %v628, %v73
  %v650 = vmul.f32 %v629, %v73
  %v651 = vmul.f32 %v630, %v73
  %v652 = vmul.f32 %v631, %v73
  %v653 = vmul.f32 %v632, %v73
  %v654 = vmul.f32 %v633, %v73
  %v655 = vmul.f32 %v634, %v73
  %v656 = vmul.f32 %v635, %v73
  %v657 = vmul.f32 %v636, %v73
  %v658 = vmul.f32 %v637, %v73
  %v659 = vmul.f32 %v638, %v73
  %v660 = vadd.f32 %v639, %v101
  %v661 = vadd.f32 %v640, %v101
  %v662 = vadd.f32 %v641, %v101
  %v663 = vadd.f32 %v642, %v101
  %v664 = vadd.f32 %v643, %v101
  %v665 = vadd.f32 %v644, %v101
  %v666 = vadd.f32 %v645, %v101
  %v667 = vadd.f32 %v646, %v101
  %v668 = vadd.f32 %v647, %v101
  %v669 = vadd.f32 %v648, %v101
  %v670 = vadd.f32 %v649, %v101
  %v671 = vadd.f32 %v650, %v101
  %v672 = vadd.f32 %v651, %v101
  %v673 = vadd.f32 %v652, %v101
  %v674 = vadd.f32 %v653, %v101
  %v675 = vadd.f32 %v654, %v101
  %v676 = vadd.f32 %v655, %v101
  %v677 = vadd.f32 %v656, %v101
  %v678 = vadd.f32 %v657, %v101
  %v679 = vadd.f32 %v658, %v101
  %v680 = vadd.f32 %v659, %v101
  %v681 = vmax.f32 %v660, 0.0
  %v682 = vmax.f32 %v661, 0.0
  %v683 = vmax.f32 %v662, 0.0
  %v684 = vmax.f32 %v663, 0.0
  %v685 = vmax.f32 %v664, 0.0
  %v686 = vmax.f32 %v665, 0.0
  %v687 = vmax.f32 %v666, 0.0
  %v688 = vmax.f32 %v667, 0.0
  %v689 = vmax.f32 %v668, 0.0
  %v690 = vmax.f32 %v669, 0.0
  %v691 = vmax.f32 %v670, 0.0
  %v692 = vmax.f32 %v671, 0.0
  %v693 = vmax.f32 %v672, 0.0
  %v694 = vmax.f32 %v673, 0.0
  %v695 = vmax.f32 %v674, 0.0
  %v696 = vmax.f32 %v675, 0.0
  %v697 = vmax.f32 %v676, 0.0
  %v698 = vmax.f32 %v677, 0.0
  %v699 = vmax.f32 %v678, 0.0
  %v700 = vmax.f32 %v679, 0.0
  %v701 = vmax.f32 %v680, 0.0
  %v702 = vpack.c.bf16 %v682, %v681
  %v703 = vpack.c.bf16 %v684, %v683
  %v704 = vpack.c.bf16 %v686, %v685
  %v705 = vpack.c.bf16 %v688, %v687
  %v706 = vpack.c.bf16 %v690, %v689
  %v707 = vpack.c.bf16 %v692, %v691
  %v708 = vpack.c.bf16 %v694, %v693
  %v709 = vpack.c.bf16 %v696, %v695
  %v710 = vpack.c.bf16 %v698, %v697
  %v711 = vpack.c.bf16 %v700, %v699
  %v712 = vpack.c.bf16 %v701, %v701
  %s713 = scalar_lea.vmem %s1, 24
  %v714 = vld [vmem:[%s713] sm:$0xf]
  %v716 = vsel %vm280, %v702, 0
  %v719 = vsel %vm280, %v703, 0
  %v722 = vsel %vm280, %v704, 0
  %v725 = vsel %vm280, %v705, 0
  %v728 = vsel %vm280, %v706, 0
  %v731 = vsel %vm280, %v707, 0
  %v734 = vsel %vm280, %v708, 0
  %v737 = vsel %vm280, %v709, 0
  %v740 = vsel %vm280, %v710, 0
  %v743 = vsel %vm280, %v711, 0
  %v746 = vsel %vm280, %v712, 0
  %v749 = vsel %vm314, %v714, 0
  %751 = vmatprep.subr.bf16.mxu0 0
  %752 = vmatpush1.bf16.msra.mxu0 %v749
  %753 = vmatprep.subr.bf16.mxu0 0
  %754 = vmatpush1.bf16.msra.mxu0 0
  %755 = vmatprep.subr.bf16.mxu0 0
  %756 = vmatpush1.bf16.msra.mxu0 0
  %757 = vmatprep.subr.bf16.mxu0 0
  %758 = vmatpush1.bf16.msra.mxu0 0
  %759 = vmatprep.subr.bf16.mxu0 0
  %760 = vmatpush1.bf16.msra.mxu0 0
  %761 = vmatprep.subr.bf16.mxu0 0
  %762 = vmatpush1.bf16.msra.mxu0 0
  %763 = vmatprep.subr.bf16.mxu0 0
  %764 = vmatpush1.bf16.msra.mxu0 0
  %765 = vmatprep.subr.bf16.mxu0 0
  %766 = vmatpush1.bf16.msra.mxu0 0
  %767 = vmatprep.subr.bf16.mxu0 0
  %768 = vmatpush1.bf16.msra.mxu0 0
  %769 = vmatprep.subr.bf16.mxu0 0
  %770 = vmatpush1.bf16.msra.mxu0 0
  %771 = vmatprep.subr.bf16.mxu0 0
  %772 = vmatpush1.bf16.msra.mxu0 0
  %773 = vmatprep.subr.bf16.mxu0 0
  %774 = vmatpush1.bf16.msra.mxu0 0
  %775 = vmatprep.subr.bf16.mxu0 0
  %776 = vmatpush1.bf16.msra.mxu0 0
  %777 = vmatprep.subr.bf16.mxu0 0
  %778 = vmatpush1.bf16.msra.mxu0 0
  %779 = vmatprep.subr.bf16.mxu0 0
  %780 = vmatpush1.bf16.msra.mxu0 0
  %781 = vmatprep.subr.bf16.mxu0 0
  %782 = vmatpush1.bf16.msra.mxu0 0
  %783 = vmatprep.mubr.bf16.mxu0 0
  %784 = vmatmul.mubr.bf16.gmra.mrb[0].mxu0 %v716
  %v785 = vpop.f32.mrb[0].mxu0
  %v786 = vadd.f32 0.0, %v785
  %v787 = vpop.f32.mrb[0].mxu0
  %v788 = vpop.f32.mrb[0].mxu0
  %v789 = vadd.f32 0.0, %v788
  %v790 = vpop.f32.mrb[0].mxu0
  %791 = vmatprep.mubr.bf16.mxu0 0
  %792 = vmatmul.mubr.bf16.gmra.mrb[0].mxu0 %v719
  %v793 = vpop.f32.mrb[0].mxu0
  %v794 = vadd.f32 0.0, %v793
  %v795 = vpop.f32.mrb[0].mxu0
  %v796 = vpop.f32.mrb[0].mxu0
  %v797 = vadd.f32 0.0, %v796
  %v798 = vpop.f32.mrb[0].mxu0
  %799 = vmatprep.mubr.bf16.mxu0 0
  %800 = vmatmul.mubr.bf16.gmra.mrb[0].mxu0 %v722
  %v801 = vpop.f32.mrb[0].mxu0
  %v802 = vadd.f32 0.0, %v801
  %v803 = vpop.f32.mrb[0].mxu0
  %v804 = vpop.f32.mrb[0].mxu0
  %v805 = vadd.f32 0.0, %v804
  %v806 = vpop.f32.mrb[0].mxu0
  %807 = vmatprep.mubr.bf16.mxu0 0
  %808 = vmatmul.mubr.bf16.gmra.mrb[0].mxu0 %v725
  %v809 = vpop.f32.mrb[0].mxu0
  %v810 = vadd.f32 0.0, %v809
  %v811 = vpop.f32.mrb[0].mxu0
  %v812 = vpop.f32.mrb[0].mxu0
  %v813 = vadd.f32 0.0, %v812
  %v814 = vpop.f32.mrb[0].mxu0
  %815 = vmatprep.mubr.bf16.mxu0 0
  %816 = vmatmul.mubr.bf16.gmra.mrb[0].mxu0 %v728
  %v817 = vpop.f32.mrb[0].mxu0
  %v818 = vadd.f32 0.0, %v817
  %v819 = vpop.f32.mrb[0].mxu0
  %v820 = vpop.f32.mrb[0].mxu0
  %v821 = vadd.f32 0.0, %v820
  %v822 = vpop.f32.mrb[0].mxu0
  %823 = vmatprep.mubr.bf16.mxu0 0
  %824 = vmatmul.mubr.bf16.gmra.mrb[0].mxu0 %v731
  %v825 = vpop.f32.mrb[0].mxu0
  %v826 = vadd.f32 0.0, %v825
  %v827 = vpop.f32.mrb[0].mxu0
  %v828 = vpop.f32.mrb[0].mxu0
  %v829 = vadd.f32 0.0, %v828
  %v830 = vpop.f32.mrb[0].mxu0
  %831 = vmatprep.mubr.bf16.mxu0 0
  %832 = vmatmul.mubr.bf16.gmra.mrb[0].mxu0 %v734
  %v833 = vpop.f32.mrb[0].mxu0
  %v834 = vadd.f32 0.0, %v833
  %v835 = vpop.f32.mrb[0].mxu0
  %v836 = vpop.f32.mrb[0].mxu0
  %v837 = vadd.f32 0.0, %v836
  %v838 = vpop.f32.mrb[0].mxu0
  %839 = vmatprep.mubr.bf16.mxu0 0
  %840 = vmatmul.mubr.bf16.gmra.mrb[0].mxu0 %v737
  %v841 = vpop.f32.mrb[0].mxu0
  %v842 = vadd.f32 0.0, %v841
  %v843 = vpop.f32.mrb[0].mxu0
  %v844 = vpop.f32.mrb[0].mxu0
  %v845 = vadd.f32 0.0, %v844
  %v846 = vpop.f32.mrb[0].mxu0
  %847 = vmatprep.mubr.bf16.mxu0 0
  %848 = vmatmul.mubr.bf16.gmra.mrb[0].mxu0 %v740
  %v849 = vpop.f32.mrb[0].mxu0
  %v850 = vadd.f32 0.0, %v849
  %v851 = vpop.f32.mrb[0].mxu0
  %v852 = vpop.f32.mrb[0].mxu0
  %v853 = vadd.f32 0.0, %v852
  %v854 = vpop.f32.mrb[0].mxu0
  %855 = vmatprep.mubr.bf16.mxu0 0
  %856 = vmatmul.mubr.bf16.gmra.mrb[0].mxu0 %v743
  %v857 = vpop.f32.mrb[0].mxu0
  %v858 = vadd.f32 0.0, %v857
  %v859 = vpop.f32.mrb[0].mxu0
  %v860 = vpop.f32.mrb[0].mxu0
  %v861 = vadd.f32 0.0, %v860
  %v862 = vpop.f32.mrb[0].mxu0
  %863 = vmatprep.mubr.bf16.mxu0 0
  %864 = vmatmul.mubr.bf16.gmra.mrb[0].mxu0 %v746
  %v865 = vpop.f32.mrb[0].mxu0
  %v866 = vpop.f32.mrb[0].mxu0
  %v867 = vpop.f32.mrb[0].mxu0
  %v868 = vpop.f32.mrb[0].mxu0
  %869 = vdwg.mxu0
  %v870 = vadd.f32 %v508, %v786
  %v871 = vadd.f32 %v511, %v789
  %v872 = vadd.f32 %v516, %v794
  %v873 = vadd.f32 %v519, %v797
  %v874 = vadd.f32 %v524, %v802
  %v875 = vadd.f32 %v527, %v805
  %v876 = vadd.f32 %v532, %v810
  %v877 = vadd.f32 %v535, %v813
  %v878 = vadd.f32 %v540, %v818
  %v879 = vadd.f32 %v543, %v821
  %v880 = vadd.f32 %v548, %v826
  %v881 = vadd.f32 %v551, %v829
  %v882 = vadd.f32 %v556, %v834
  %v883 = vadd.f32 %v559, %v837
  %v884 = vadd.f32 %v564, %v842
  %v885 = vadd.f32 %v567, %v845
  %v886 = vadd.f32 %v572, %v850
  %v887 = vadd.f32 %v575, %v853
  %v888 = vadd.f32 %v580, %v858
  %v889 = vadd.f32 %v583, %v861
  %s890 = scalar_lea.vmem %s1, 4
  %v891 = vld [vmem:[%s890] sm:$0xf]
  %s892 = scalar_lea.vmem %s1, 16
  %v893 = vld [vmem:[%s892] sm:$0xf]
  %v895 = vsel %vm314, %v893, 0
  %897 = vmatprep.subr.bf16.mxu0 0
  %898 = vmatpush1.bf16.msra.mxu0 %v895
  %899 = vmatprep.subr.bf16.mxu0 0
  %900 = vmatpush1.bf16.msra.mxu0 0
  %901 = vmatprep.subr.bf16.mxu0 0
  %902 = vmatpush1.bf16.msra.mxu0 0
  %903 = vmatprep.subr.bf16.mxu0 0
  %904 = vmatpush1.bf16.msra.mxu0 0
  %905 = vmatprep.subr.bf16.mxu0 0
  %906 = vmatpush1.bf16.msra.mxu0 0
  %907 = vmatprep.subr.bf16.mxu0 0
  %908 = vmatpush1.bf16.msra.mxu0 0
  %909 = vmatprep.subr.bf16.mxu0 0
  %910 = vmatpush1.bf16.msra.mxu0 0
  %911 = vmatprep.subr.bf16.mxu0 0
  %912 = vmatpush1.bf16.msra.mxu0 0
  %913 = vmatprep.subr.bf16.mxu0 0
  %914 = vmatpush1.bf16.msra.mxu0 0
  %915 = vmatprep.subr.bf16.mxu0 0
  %916 = vmatpush1.bf16.msra.mxu0 0
  %917 = vmatprep.subr.bf16.mxu0 0
  %918 = vmatpush1.bf16.msra.mxu0 0
  %919 = vmatprep.subr.bf16.mxu0 0
  %920 = vmatpush1.bf16.msra.mxu0 0
  %921 = vmatprep.subr.bf16.mxu0 0
  %922 = vmatpush1.bf16.msra.mxu0 0
  %923 = vmatprep.subr.bf16.mxu0 0
  %924 = vmatpush1.bf16.msra.mxu0 0
  %925 = vmatprep.subr.bf16.mxu0 0
  %926 = vmatpush1.bf16.msra.mxu0 0
  %927 = vmatprep.subr.bf16.mxu0 0
  %928 = vmatpush1.bf16.msra.mxu0 0
  %929 = vmatprep.mubr.bf16.mxu0 0
  %930 = vmatmul.mubr.bf16.gmra.mrb[0].mxu0 %v282
  %v931 = vpop.f32.mrb[0].mxu0
  %v932 = vadd.f32 0.0, %v931
  %v933 = vpop.f32.mrb[0].mxu0
  %v934 = vpop.f32.mrb[0].mxu0
  %v935 = vadd.f32 0.0, %v934
  %v936 = vpop.f32.mrb[0].mxu0
  %937 = vmatprep.mubr.bf16.mxu0 0
  %938 = vmatmul.mubr.bf16.gmra.mrb[0].mxu0 %v285
  %v939 = vpop.f32.mrb[0].mxu0
  %v940 = vadd.f32 0.0, %v939
  %v941 = vpop.f32.mrb[0].mxu0
  %v942 = vpop.f32.mrb[0].mxu0
  %v943 = vadd.f32 0.0, %v942
  %v944 = vpop.f32.mrb[0].mxu0
  %945 = vmatprep.mubr.bf16.mxu0 0
  %946 = vmatmul.mubr.bf16.gmra.mrb[0].mxu0 %v288
  %v947 = vpop.f32.mrb[0].mxu0
  %v948 = vadd.f32 0.0, %v947
  %v949 = vpop.f32.mrb[0].mxu0
  %v950 = vpop.f32.mrb[0].mxu0
  %v951 = vadd.f32 0.0, %v950
  %v952 = vpop.f32.mrb[0].mxu0
  %953 = vmatprep.mubr.bf16.mxu0 0
  %954 = vmatmul.mubr.bf16.gmra.mrb[0].mxu0 %v291
  %v955 = vpop.f32.mrb[0].mxu0
  %v956 = vadd.f32 0.0, %v955
  %v957 = vpop.f32.mrb[0].mxu0
  %v958 = vpop.f32.mrb[0].mxu0
  %v959 = vadd.f32 0.0, %v958
  %v960 = vpop.f32.mrb[0].mxu0
  %961 = vmatprep.mubr.bf16.mxu0 0
  %962 = vmatmul.mubr.bf16.gmra.mrb[0].mxu0 %v294
  %v963 = vpop.f32.mrb[0].mxu0
  %v964 = vadd.f32 0.0, %v963
  %v965 = vpop.f32.mrb[0].mxu0
  %v966 = vpop.f32.mrb[0].mxu0
  %v967 = vadd.f32 0.0, %v966
  %v968 = vpop.f32.mrb[0].mxu0
  %969 = vmatprep.mubr.bf16.mxu0 0
  %970 = vmatmul.mubr.bf16.gmra.mrb[0].mxu0 %v297
  %v971 = vpop.f32.mrb[0].mxu0
  %v972 = vadd.f32 0.0, %v971
  %v973 = vpop.f32.mrb[0].mxu0
  %v974 = vpop.f32.mrb[0].mxu0
  %v975 = vadd.f32 0.0, %v974
  %v976 = vpop.f32.mrb[0].mxu0
  %977 = vmatprep.mubr.bf16.mxu0 0
  %978 = vmatmul.mubr.bf16.gmra.mrb[0].mxu0 %v300
  %v979 = vpop.f32.mrb[0].mxu0
  %v980 = vadd.f32 0.0, %v979
  %v981 = vpop.f32.mrb[0].mxu0
  %v982 = vpop.f32.mrb[0].mxu0
  %v983 = vadd.f32 0.0, %v982
  %v984 = vpop.f32.mrb[0].mxu0
  %985 = vmatprep.mubr.bf16.mxu0 0
  %986 = vmatmul.mubr.bf16.gmra.mrb[0].mxu0 %v303
  %v987 = vpop.f32.mrb[0].mxu0
  %v988 = vadd.f32 0.0, %v987
  %v989 = vpop.f32.mrb[0].mxu0
  %v990 = vpop.f32.mrb[0].mxu0
  %v991 = vadd.f32 0.0, %v990
  %v992 = vpop.f32.mrb[0].mxu0
  %993 = vmatprep.mubr.bf16.mxu0 0
  %994 = vmatmul.mubr.bf16.gmra.mrb[0].mxu0 %v306
  %v995 = vpop.f32.mrb[0].mxu0
  %v996 = vadd.f32 0.0, %v995
  %v997 = vpop.f32.mrb[0].mxu0
  %v998 = vpop.f32.mrb[0].mxu0
  %v999 = vadd.f32 0.0, %v998
  %v1000 = vpop.f32.mrb[0].mxu0
  %1001 = vmatprep.mubr.bf16.mxu0 0
  %1002 = vmatmul.mubr.bf16.gmra.mrb[0].mxu0 %v309
  %v1003 = vpop.f32.mrb[0].mxu0
  %v1004 = vadd.f32 0.0, %v1003
  %v1005 = vpop.f32.mrb[0].mxu0
  %v1006 = vpop.f32.mrb[0].mxu0
  %v1007 = vadd.f32 0.0, %v1006
  %v1008 = vpop.f32.mrb[0].mxu0
  %1009 = vmatprep.mubr.bf16.mxu0 0
  %1010 = vmatmul.mubr.bf16.gmra.mrb[0].mxu0 %v312
  %v1011 = vpop.f32.mrb[0].mxu0
  %v1012 = vadd.f32 0.0, %v1011
  %v1013 = vpop.f32.mrb[0].mxu0
  %v1014 = vpop.f32.mrb[0].mxu0
  %v1015 = vpop.f32.mrb[0].mxu0
  %1016 = vdwg.mxu0
  %v1018 = vsel %vm314, %v891, 0
  %1020 = vmatprep.subr.bf16.mxu0 0
  %1021 = vmatpush1.bf16.msra.mxu0 %v1018
  %1022 = vmatprep.subr.bf16.mxu0 0
  %1023 = vmatpush1.bf16.msra.mxu0 0
  %1024 = vmatprep.subr.bf16.mxu0 0
  %1025 = vmatpush1.bf16.msra.mxu0 0
  %1026 = vmatprep.subr.bf16.mxu0 0
  %1027 = vmatpush1.bf16.msra.mxu0 0
  %1028 = vmatprep.subr.bf16.mxu0 0
  %1029 = vmatpush1.bf16.msra.mxu0 0
  %1030 = vmatprep.subr.bf16.mxu0 0
  %1031 = vmatpush1.bf16.msra.mxu0 0
  %1032 = vmatprep.subr.bf16.mxu0 0
  %1033 = vmatpush1.bf16.msra.mxu0 0
  %1034 = vmatprep.subr.bf16.mxu0 0
  %1035 = vmatpush1.bf16.msra.mxu0 0
  %1036 = vmatprep.subr.bf16.mxu0 0
  %1037 = vmatpush1.bf16.msra.mxu0 0
  %1038 = vmatprep.subr.bf16.mxu0 0
  %1039 = vmatpush1.bf16.msra.mxu0 0
  %1040 = vmatprep.subr.bf16.mxu0 0
  %1041 = vmatpush1.bf16.msra.mxu0 0
  %1042 = vmatprep.subr.bf16.mxu0 0
  %1043 = vmatpush1.bf16.msra.mxu0 0
  %1044 = vmatprep.subr.bf16.mxu0 0
  %1045 = vmatpush1.bf16.msra.mxu0 0
  %1046 = vmatprep.subr.bf16.mxu0 0
  %1047 = vmatpush1.bf16.msra.mxu0 0
  %1048 = vmatprep.subr.bf16.mxu0 0
  %1049 = vmatpush1.bf16.msra.mxu0 0
  %1050 = vmatprep.subr.bf16.mxu0 0
  %1051 = vmatpush1.bf16.msra.mxu0 0
  %1052 = vmatprep.mubr.bf16.mxu0 0
  %1053 = vmatmul.mubr.bf16.gmra.mrb[0].mxu0 %v438
  %v1054 = vpop.f32.mrb[0].mxu0
  %v1055 = vadd.f32 %v932, %v1054
  %v1056 = vpop.f32.mrb[0].mxu0
  %v1057 = vpop.f32.mrb[0].mxu0
  %v1058 = vadd.f32 %v935, %v1057
  %v1059 = vpop.f32.mrb[0].mxu0
  %1060 = vmatprep.mubr.bf16.mxu0 0
  %1061 = vmatmul.mubr.bf16.gmra.mrb[0].mxu0 %v441
  %v1062 = vpop.f32.mrb[0].mxu0
  %v1063 = vadd.f32 %v940, %v1062
  %v1064 = vpop.f32.mrb[0].mxu0
  %v1065 = vpop.f32.mrb[0].mxu0
  %v1066 = vadd.f32 %v943, %v1065
  %v1067 = vpop.f32.mrb[0].mxu0
  %1068 = vmatprep.mubr.bf16.mxu0 0
  %1069 = vmatmul.mubr.bf16.gmra.mrb[0].mxu0 %v444
  %v1070 = vpop.f32.mrb[0].mxu0
  %v1071 = vadd.f32 %v948, %v1070
  %v1072 = vpop.f32.mrb[0].mxu0
  %v1073 = vpop.f32.mrb[0].mxu0
  %v1074 = vadd.f32 %v951, %v1073
  %v1075 = vpop.f32.mrb[0].mxu0
  %1076 = vmatprep.mubr.bf16.mxu0 0
  %1077 = vmatmul.mubr.bf16.gmra.mrb[0].mxu0 %v447
  %v1078 = vpop.f32.mrb[0].mxu0
  %v1079 = vadd.f32 %v956, %v1078
  %v1080 = vpop.f32.mrb[0].mxu0
  %v1081 = vpop.f32.mrb[0].mxu0
  %v1082 = vadd.f32 %v959, %v1081
  %v1083 = vpop.f32.mrb[0].mxu0
  %1084 = vmatprep.mubr.bf16.mxu0 0
  %1085 = vmatmul.mubr.bf16.gmra.mrb[0].mxu0 %v450
  %v1086 = vpop.f32.mrb[0].mxu0
  %v1087 = vadd.f32 %v964, %v1086
  %v1088 = vpop.f32.mrb[0].mxu0
  %v1089 = vpop.f32.mrb[0].mxu0
  %v1090 = vadd.f32 %v967, %v1089
  %v1091 = vpop.f32.mrb[0].mxu0
  %1092 = vmatprep.mubr.bf16.mxu0 0
  %1093 = vmatmul.mubr.bf16.gmra.mrb[0].mxu0 %v453
  %v1094 = vpop.f32.mrb[0].mxu0
  %v1095 = vadd.f32 %v972, %v1094
  %v1096 = vpop.f32.mrb[0].mxu0
  %v1097 = vpop.f32.mrb[0].mxu0
  %v1098 = vadd.f32 %v975, %v1097
  %v1099 = vpop.f32.mrb[0].mxu0
  %1100 = vmatprep.mubr.bf16.mxu0 0
  %1101 = vmatmul.mubr.bf16.gmra.mrb[0].mxu0 %v456
  %v1102 = vpop.f32.mrb[0].mxu0
  %v1103 = vadd.f32 %v980, %v1102
  %v1104 = vpop.f32.mrb[0].mxu0
  %v1105 = vpop.f32.mrb[0].mxu0
  %v1106 = vadd.f32 %v983, %v1105
  %v1107 = vpop.f32.mrb[0].mxu0
  %1108 = vmatprep.mubr.bf16.mxu0 0
  %1109 = vmatmul.mubr.bf16.gmra.mrb[0].mxu0 %v459
  %v1110 = vpop.f32.mrb[0].mxu0
  %v1111 = vadd.f32 %v988, %v1110
  %v1112 = vpop.f32.mrb[0].mxu0
  %v1113 = vpop.f32.mrb[0].mxu0
  %v1114 = vadd.f32 %v991, %v1113
  %v1115 = vpop.f32.mrb[0].mxu0
  %1116 = vmatprep.mubr.bf16.mxu0 0
  %1117 = vmatmul.mubr.bf16.gmra.mrb[0].mxu0 %v462
  %v1118 = vpop.f32.mrb[0].mxu0
  %v1119 = vadd.f32 %v996, %v1118
  %v1120 = vpop.f32.mrb[0].mxu0
  %v1121 = vpop.f32.mrb[0].mxu0
  %v1122 = vadd.f32 %v999, %v1121
  %v1123 = vpop.f32.mrb[0].mxu0
  %1124 = vmatprep.mubr.bf16.mxu0 0
  %1125 = vmatmul.mubr.bf16.gmra.mrb[0].mxu0 %v465
  %v1126 = vpop.f32.mrb[0].mxu0
  %v1127 = vadd.f32 %v1004, %v1126
  %v1128 = vpop.f32.mrb[0].mxu0
  %v1129 = vpop.f32.mrb[0].mxu0
  %v1130 = vadd.f32 %v1007, %v1129
  %v1131 = vpop.f32.mrb[0].mxu0
  %1132 = vmatprep.mubr.bf16.mxu0 0
  %1133 = vmatmul.mubr.bf16.gmra.mrb[0].mxu0 %v468
  %v1134 = vpop.f32.mrb[0].mxu0
  %v1135 = vadd.f32 %v1012, %v1134
  %v1136 = vpop.f32.mrb[0].mxu0
  %v1137 = vpop.f32.mrb[0].mxu0
  %v1138 = vpop.f32.mrb[0].mxu0
  %1139 = vdwg.mxu0
  %s1140 = scalar_lea.vmem %s1, 28
  %v1141 = vld [vmem:[%s1140] sm:$0xf]
  %v1143 = vsel %vm314, %v1141, 0
  %1145 = vmatprep.subr.bf16.mxu0 0
  %1146 = vmatpush1.bf16.msra.mxu0 %v1143
  %1147 = vmatprep.subr.bf16.mxu0 0
  %1148 = vmatpush1.bf16.msra.mxu0 0
  %1149 = vmatprep.subr.bf16.mxu0 0
  %1150 = vmatpush1.bf16.msra.mxu0 0
  %1151 = vmatprep.subr.bf16.mxu0 0
  %1152 = vmatpush1.bf16.msra.mxu0 0
  %1153 = vmatprep.subr.bf16.mxu0 0
  %1154 = vmatpush1.bf16.msra.mxu0 0
  %1155 = vmatprep.subr.bf16.mxu0 0
  %1156 = vmatpush1.bf16.msra.mxu0 0
  %1157 = vmatprep.subr.bf16.mxu0 0
  %1158 = vmatpush1.bf16.msra.mxu0 0
  %1159 = vmatprep.subr.bf16.mxu0 0
  %1160 = vmatpush1.bf16.msra.mxu0 0
  %1161 = vmatprep.subr.bf16.mxu0 0
  %1162 = vmatpush1.bf16.msra.mxu0 0
  %1163 = vmatprep.subr.bf16.mxu0 0
  %1164 = vmatpush1.bf16.msra.mxu0 0
  %1165 = vmatprep.subr.bf16.mxu0 0
  %1166 = vmatpush1.bf16.msra.mxu0 0
  %1167 = vmatprep.subr.bf16.mxu0 0
  %1168 = vmatpush1.bf16.msra.mxu0 0
  %1169 = vmatprep.subr.bf16.mxu0 0
  %1170 = vmatpush1.bf16.msra.mxu0 0
  %1171 = vmatprep.subr.bf16.mxu0 0
  %1172 = vmatpush1.bf16.msra.mxu0 0
  %1173 = vmatprep.subr.bf16.mxu0 0
  %1174 = vmatpush1.bf16.msra.mxu0 0
  %1175 = vmatprep.subr.bf16.mxu0 0
  %1176 = vmatpush1.bf16.msra.mxu0 0
  %1177 = vmatprep.mubr.bf16.mxu0 0
  %1178 = vmatmul.mubr.bf16.gmra.mrb[0].mxu0 %v716
  %v1179 = vpop.f32.mrb[0].mxu0
  %v1180 = vadd.f32 0.0, %v1179
  %v1181 = vpop.f32.mrb[0].mxu0
  %v1182 = vpop.f32.mrb[0].mxu0
  %v1183 = vadd.f32 0.0, %v1182
  %v1184 = vpop.f32.mrb[0].mxu0
  %1185 = vmatprep.mubr.bf16.mxu0 0
  %1186 = vmatmul.mubr.bf16.gmra.mrb[0].mxu0 %v719
  %v1187 = vpop.f32.mrb[0].mxu0
  %v1188 = vadd.f32 0.0, %v1187
  %v1189 = vpop.f32.mrb[0].mxu0
  %v1190 = vpop.f32.mrb[0].mxu0
  %v1191 = vadd.f32 0.0, %v1190
  %v1192 = vpop.f32.mrb[0].mxu0
  %1193 = vmatprep.mubr.bf16.mxu0 0
  %1194 = vmatmul.mubr.bf16.gmra.mrb[0].mxu0 %v722
  %v1195 = vpop.f32.mrb[0].mxu0
  %v1196 = vadd.f32 0.0, %v1195
  %v1197 = vpop.f32.mrb[0].mxu0
  %v1198 = vpop.f32.mrb[0].mxu0
  %v1199 = vadd.f32 0.0, %v1198
  %v1200 = vpop.f32.mrb[0].mxu0
  %1201 = vmatprep.mubr.bf16.mxu0 0
  %1202 = vmatmul.mubr.bf16.gmra.mrb[0].mxu0 %v725
  %v1203 = vpop.f32.mrb[0].mxu0
  %v1204 = vadd.f32 0.0, %v1203
  %v1205 = vpop.f32.mrb[0].mxu0
  %v1206 = vpop.f32.mrb[0].mxu0
  %v1207 = vadd.f32 0.0, %v1206
  %v1208 = vpop.f32.mrb[0].mxu0
  %1209 = vmatprep.mubr.bf16.mxu0 0
  %1210 = vmatmul.mubr.bf16.gmra.mrb[0].mxu0 %v728
  %v1211 = vpop.f32.mrb[0].mxu0
  %v1212 = vadd.f32 0.0, %v1211
  %v1213 = vpop.f32.mrb[0].mxu0
  %v1214 = vpop.f32.mrb[0].mxu0
  %v1215 = vadd.f32 0.0, %v1214
  %v1216 = vpop.f32.mrb[0].mxu0
  %1217 = vmatprep.mubr.bf16.mxu0 0
  %1218 = vmatmul.mubr.bf16.gmra.mrb[0].mxu0 %v731
  %v1219 = vpop.f32.mrb[0].mxu0
  %v1220 = vadd.f32 0.0, %v1219
  %v1221 = vpop.f32.mrb[0].mxu0
  %v1222 = vpop.f32.mrb[0].mxu0
  %v1223 = vadd.f32 0.0, %v1222
  %v1224 = vpop.f32.mrb[0].mxu0
  %1225 = vmatprep.mubr.bf16.mxu0 0
  %1226 = vmatmul.mubr.bf16.gmra.mrb[0].mxu0 %v734
  %v1227 = vpop.f32.mrb[0].mxu0
  %v1228 = vadd.f32 0.0, %v1227
  %v1229 = vpop.f32.mrb[0].mxu0
  %v1230 = vpop.f32.mrb[0].mxu0
  %v1231 = vadd.f32 0.0, %v1230
  %v1232 = vpop.f32.mrb[0].mxu0
  %1233 = vmatprep.mubr.bf16.mxu0 0
  %1234 = vmatmul.mubr.bf16.gmra.mrb[0].mxu0 %v737
  %v1235 = vpop.f32.mrb[0].mxu0
  %v1236 = vadd.f32 0.0, %v1235
  %v1237 = vpop.f32.mrb[0].mxu0
  %v1238 = vpop.f32.mrb[0].mxu0
  %v1239 = vadd.f32 0.0, %v1238
  %v1240 = vpop.f32.mrb[0].mxu0
  %1241 = vmatprep.mubr.bf16.mxu0 0
  %1242 = vmatmul.mubr.bf16.gmra.mrb[0].mxu0 %v740
  %v1243 = vpop.f32.mrb[0].mxu0
  %v1244 = vadd.f32 0.0, %v1243
  %v1245 = vpop.f32.mrb[0].mxu0
  %v1246 = vpop.f32.mrb[0].mxu0
  %v1247 = vadd.f32 0.0, %v1246
  %v1248 = vpop.f32.mrb[0].mxu0
  %1249 = vmatprep.mubr.bf16.mxu0 0
  %1250 = vmatmul.mubr.bf16.gmra.mrb[0].mxu0 %v743
  %v1251 = vpop.f32.mrb[0].mxu0
  %v1252 = vadd.f32 0.0, %v1251
  %v1253 = vpop.f32.mrb[0].mxu0
  %v1254 = vpop.f32.mrb[0].mxu0
  %v1255 = vadd.f32 0.0, %v1254
  %v1256 = vpop.f32.mrb[0].mxu0
  %1257 = vmatprep.mubr.bf16.mxu0 0
  %1258 = vmatmul.mubr.bf16.gmra.mrb[0].mxu0 %v746
  %v1259 = vpop.f32.mrb[0].mxu0
  %v1260 = vadd.f32 0.0, %v1259
  %v1261 = vpop.f32.mrb[0].mxu0
  %v1262 = vpop.f32.mrb[0].mxu0
  %v1263 = vpop.f32.mrb[0].mxu0
  %1264 = vdwg.mxu0
  %v1265 = vadd.f32 %v1055, %v1180
  %v1266 = vadd.f32 %v1058, %v1183
  %v1267 = vadd.f32 %v1063, %v1188
  %v1268 = vadd.f32 %v1066, %v1191
  %v1269 = vadd.f32 %v1071, %v1196
  %v1270 = vadd.f32 %v1074, %v1199
  %v1271 = vadd.f32 %v1079, %v1204
  %v1272 = vadd.f32 %v1082, %v1207
  %v1273 = vadd.f32 %v1087, %v1212
  %v1274 = vadd.f32 %v1090, %v1215
  %v1275 = vadd.f32 %v1095, %v1220
  %v1276 = vadd.f32 %v1098, %v1223
  %v1277 = vadd.f32 %v1103, %v1228
  %v1278 = vadd.f32 %v1106, %v1231
  %v1279 = vadd.f32 %v1111, %v1236
  %v1280 = vadd.f32 %v1114, %v1239
  %v1281 = vadd.f32 %v1119, %v1244
  %v1282 = vadd.f32 %v1122, %v1247
  %v1283 = vadd.f32 %v1127, %v1252
  %v1284 = vadd.f32 %v1130, %v1255
  %v1285 = vadd.f32 %v1135, %v1260
  %vm1307 = vcmask 1046528
  %v1308 = vrot.slane %v1265, 1
  %v1309 = vrot.slane %v1266, 1
  %v1310 = vsel %vm1307, %v1308, %v1309
  %v1311 = vrot.slane %v1267, 1
  %v1312 = vsel %vm1307, %v1309, %v1311
  %v1313 = vrot.slane %v1268, 1
  %v1314 = vsel %vm1307, %v1311, %v1313
  %v1315 = vrot.slane %v1269, 1
  %v1316 = vsel %vm1307, %v1313, %v1315
  %v1317 = vrot.slane %v1270, 1
  %v1318 = vsel %vm1307, %v1315, %v1317
  %v1319 = vrot.slane %v1271, 1
  %v1320 = vsel %vm1307, %v1317, %v1319
  %v1321 = vrot.slane %v1272, 1
  %v1322 = vsel %vm1307, %v1319, %v1321
  %v1323 = vrot.slane %v1273, 1
  %v1324 = vsel %vm1307, %v1321, %v1323
  %v1325 = vrot.slane %v1274, 1
  %v1326 = vsel %vm1307, %v1323, %v1325
  %v1327 = vrot.slane %v1275, 1
  %v1328 = vsel %vm1307, %v1325, %v1327
  %v1329 = vrot.slane %v1276, 1
  %v1330 = vsel %vm1307, %v1327, %v1329
  %v1331 = vrot.slane %v1277, 1
  %v1332 = vsel %vm1307, %v1329, %v1331
  %v1333 = vrot.slane %v1278, 1
  %v1334 = vsel %vm1307, %v1331, %v1333
  %v1335 = vrot.slane %v1279, 1
  %v1336 = vsel %vm1307, %v1333, %v1335
  %v1337 = vrot.slane %v1280, 1
  %v1338 = vsel %vm1307, %v1335, %v1337
  %v1339 = vrot.slane %v1281, 1
  %v1340 = vsel %vm1307, %v1337, %v1339
  %v1341 = vrot.slane %v1282, 1
  %v1342 = vsel %vm1307, %v1339, %v1341
  %v1343 = vrot.slane %v1283, 1
  %v1344 = vsel %vm1307, %v1341, %v1343
  %v1345 = vrot.slane %v1284, 1
  %v1346 = vsel %vm1307, %v1343, %v1345
  %v1347 = vrot.slane %v1285, 1
  %v1348 = vsel %vm1307, %v1345, %v1347
  %v1369 = vadd.f32 %v870, %v1310
  %v1370 = vadd.f32 %v871, %v1312
  %v1371 = vadd.f32 %v872, %v1314
  %v1372 = vadd.f32 %v873, %v1316
  %v1373 = vadd.f32 %v874, %v1318
  %v1374 = vadd.f32 %v875, %v1320
  %v1375 = vadd.f32 %v876, %v1322
  %v1376 = vadd.f32 %v877, %v1324
  %v1377 = vadd.f32 %v878, %v1326
  %v1378 = vadd.f32 %v879, %v1328
  %v1379 = vadd.f32 %v880, %v1330
  %v1380 = vadd.f32 %v881, %v1332
  %v1381 = vadd.f32 %v882, %v1334
  %v1382 = vadd.f32 %v883, %v1336
  %v1383 = vadd.f32 %v884, %v1338
  %v1384 = vadd.f32 %v885, %v1340
  %v1385 = vadd.f32 %v886, %v1342
  %v1386 = vadd.f32 %v887, %v1344
  %v1387 = vadd.f32 %v888, %v1346
  %v1388 = vadd.f32 %v889, %v1348
  %s1389 = scalar_lea.vmem %s1, 8
  %v1390 = vld [vmem:[%s1389] sm:$0xf]
  %s1391 = scalar_lea.vmem %s1, 20
  %v1392 = vld [vmem:[%s1391] sm:$0xf]
  %v1394 = vsel %vm314, %v1392, 0
  %1396 = vmatprep.subr.bf16.mxu0 0
  %1397 = vmatpush1.bf16.msra.mxu0 %v1394
  %1398 = vmatprep.subr.bf16.mxu0 0
  %1399 = vmatpush1.bf16.msra.mxu0 0
  %1400 = vmatprep.subr.bf16.mxu0 0
  %1401 = vmatpush1.bf16.msra.mxu0 0
  %1402 = vmatprep.subr.bf16.mxu0 0
  %1403 = vmatpush1.bf16.msra.mxu0 0
  %1404 = vmatprep.subr.bf16.mxu0 0
  %1405 = vmatpush1.bf16.msra.mxu0 0
  %1406 = vmatprep.subr.bf16.mxu0 0
  %1407 = vmatpush1.bf16.msra.mxu0 0
  %1408 = vmatprep.subr.bf16.mxu0 0
  %1409 = vmatpush1.bf16.msra.mxu0 0
  %1410 = vmatprep.subr.bf16.mxu0 0
  %1411 = vmatpush1.bf16.msra.mxu0 0
  %1412 = vmatprep.subr.bf16.mxu0 0
  %1413 = vmatpush1.bf16.msra.mxu0 0
  %1414 = vmatprep.subr.bf16.mxu0 0
  %1415 = vmatpush1.bf16.msra.mxu0 0
  %1416 = vmatprep.subr.bf16.mxu0 0
  %1417 = vmatpush1.bf16.msra.mxu0 0
  %1418 = vmatprep.subr.bf16.mxu0 0
  %1419 = vmatpush1.bf16.msra.mxu0 0
  %1420 = vmatprep.subr.bf16.mxu0 0
  %1421 = vmatpush1.bf16.msra.mxu0 0
  %1422 = vmatprep.subr.bf16.mxu0 0
  %1423 = vmatpush1.bf16.msra.mxu0 0
  %1424 = vmatprep.subr.bf16.mxu0 0
  %1425 = vmatpush1.bf16.msra.mxu0 0
  %1426 = vmatprep.subr.bf16.mxu0 0
  %1427 = vmatpush1.bf16.msra.mxu0 0
  %1428 = vmatprep.mubr.bf16.mxu0 0
  %1429 = vmatmul.mubr.bf16.gmra.mrb[0].mxu0 %v282
  %v1430 = vpop.f32.mrb[0].mxu0
  %v1431 = vadd.f32 0.0, %v1430
  %v1432 = vpop.f32.mrb[0].mxu0
  %v1433 = vpop.f32.mrb[0].mxu0
  %v1434 = vadd.f32 0.0, %v1433
  %v1435 = vpop.f32.mrb[0].mxu0
  %1436 = vmatprep.mubr.bf16.mxu0 0
  %1437 = vmatmul.mubr.bf16.gmra.mrb[0].mxu0 %v285
  %v1438 = vpop.f32.mrb[0].mxu0
  %v1439 = vadd.f32 0.0, %v1438
  %v1440 = vpop.f32.mrb[0].mxu0
  %v1441 = vpop.f32.mrb[0].mxu0
  %v1442 = vadd.f32 0.0, %v1441
  %v1443 = vpop.f32.mrb[0].mxu0
  %1444 = vmatprep.mubr.bf16.mxu0 0
  %1445 = vmatmul.mubr.bf16.gmra.mrb[0].mxu0 %v288
  %v1446 = vpop.f32.mrb[0].mxu0
  %v1447 = vadd.f32 0.0, %v1446
  %v1448 = vpop.f32.mrb[0].mxu0
  %v1449 = vpop.f32.mrb[0].mxu0
  %v1450 = vadd.f32 0.0, %v1449
  %v1451 = vpop.f32.mrb[0].mxu0
  %1452 = vmatprep.mubr.bf16.mxu0 0
  %1453 = vmatmul.mubr.bf16.gmra.mrb[0].mxu0 %v291
  %v1454 = vpop.f32.mrb[0].mxu0
  %v1455 = vadd.f32 0.0, %v1454
  %v1456 = vpop.f32.mrb[0].mxu0
  %v1457 = vpop.f32.mrb[0].mxu0
  %v1458 = vadd.f32 0.0, %v1457
  %v1459 = vpop.f32.mrb[0].mxu0
  %1460 = vmatprep.mubr.bf16.mxu0 0
  %1461 = vmatmul.mubr.bf16.gmra.mrb[0].mxu0 %v294
  %v1462 = vpop.f32.mrb[0].mxu0
  %v1463 = vadd.f32 0.0, %v1462
  %v1464 = vpop.f32.mrb[0].mxu0
  %v1465 = vpop.f32.mrb[0].mxu0
  %v1466 = vadd.f32 0.0, %v1465
  %v1467 = vpop.f32.mrb[0].mxu0
  %1468 = vmatprep.mubr.bf16.mxu0 0
  %1469 = vmatmul.mubr.bf16.gmra.mrb[0].mxu0 %v297
  %v1470 = vpop.f32.mrb[0].mxu0
  %v1471 = vadd.f32 0.0, %v1470
  %v1472 = vpop.f32.mrb[0].mxu0
  %v1473 = vpop.f32.mrb[0].mxu0
  %v1474 = vadd.f32 0.0, %v1473
  %v1475 = vpop.f32.mrb[0].mxu0
  %1476 = vmatprep.mubr.bf16.mxu0 0
  %1477 = vmatmul.mubr.bf16.gmra.mrb[0].mxu0 %v300
  %v1478 = vpop.f32.mrb[0].mxu0
  %v1479 = vadd.f32 0.0, %v1478
  %v1480 = vpop.f32.mrb[0].mxu0
  %v1481 = vpop.f32.mrb[0].mxu0
  %v1482 = vadd.f32 0.0, %v1481
  %v1483 = vpop.f32.mrb[0].mxu0
  %1484 = vmatprep.mubr.bf16.mxu0 0
  %1485 = vmatmul.mubr.bf16.gmra.mrb[0].mxu0 %v303
  %v1486 = vpop.f32.mrb[0].mxu0
  %v1487 = vadd.f32 0.0, %v1486
  %v1488 = vpop.f32.mrb[0].mxu0
  %v1489 = vpop.f32.mrb[0].mxu0
  %v1490 = vadd.f32 0.0, %v1489
  %v1491 = vpop.f32.mrb[0].mxu0
  %1492 = vmatprep.mubr.bf16.mxu0 0
  %1493 = vmatmul.mubr.bf16.gmra.mrb[0].mxu0 %v306
  %v1494 = vpop.f32.mrb[0].mxu0
  %v1495 = vadd.f32 0.0, %v1494
  %v1496 = vpop.f32.mrb[0].mxu0
  %v1497 = vpop.f32.mrb[0].mxu0
  %v1498 = vadd.f32 0.0, %v1497
  %v1499 = vpop.f32.mrb[0].mxu0
  %1500 = vmatprep.mubr.bf16.mxu0 0
  %1501 = vmatmul.mubr.bf16.gmra.mrb[0].mxu0 %v309
  %v1502 = vpop.f32.mrb[0].mxu0
  %v1503 = vadd.f32 0.0, %v1502
  %v1504 = vpop.f32.mrb[0].mxu0
  %v1505 = vpop.f32.mrb[0].mxu0
  %v1506 = vadd.f32 0.0, %v1505
  %v1507 = vpop.f32.mrb[0].mxu0
  %1508 = vmatprep.mubr.bf16.mxu0 0
  %1509 = vmatmul.mubr.bf16.gmra.mrb[0].mxu0 %v312
  %v1510 = vpop.f32.mrb[0].mxu0
  %v1511 = vadd.f32 0.0, %v1510
  %v1512 = vpop.f32.mrb[0].mxu0
  %v1513 = vpop.f32.mrb[0].mxu0
  %v1514 = vpop.f32.mrb[0].mxu0
  %1515 = vdwg.mxu0
  %v1517 = vsel %vm314, %v1390, 0
  %1519 = vmatprep.subr.bf16.mxu0 0
  %1520 = vmatpush1.bf16.msra.mxu0 %v1517
  %1521 = vmatprep.subr.bf16.mxu0 0
  %1522 = vmatpush1.bf16.msra.mxu0 0
  %1523 = vmatprep.subr.bf16.mxu0 0
  %1524 = vmatpush1.bf16.msra.mxu0 0
  %1525 = vmatprep.subr.bf16.mxu0 0
  %1526 = vmatpush1.bf16.msra.mxu0 0
  %1527 = vmatprep.subr.bf16.mxu0 0
  %1528 = vmatpush1.bf16.msra.mxu0 0
  %1529 = vmatprep.subr.bf16.mxu0 0
  %1530 = vmatpush1.bf16.msra.mxu0 0
  %1531 = vmatprep.subr.bf16.mxu0 0
  %1532 = vmatpush1.bf16.msra.mxu0 0
  %1533 = vmatprep.subr.bf16.mxu0 0
  %1534 = vmatpush1.bf16.msra.mxu0 0
  %1535 = vmatprep.subr.bf16.mxu0 0
  %1536 = vmatpush1.bf16.msra.mxu0 0
  %1537 = vmatprep.subr.bf16.mxu0 0
  %1538 = vmatpush1.bf16.msra.mxu0 0
  %1539 = vmatprep.subr.bf16.mxu0 0
  %1540 = vmatpush1.bf16.msra.mxu0 0
  %1541 = vmatprep.subr.bf16.mxu0 0
  %1542 = vmatpush1.bf16.msra.mxu0 0
  %1543 = vmatprep.subr.bf16.mxu0 0
  %1544 = vmatpush1.bf16.msra.mxu0 0
  %1545 = vmatprep.subr.bf16.mxu0 0
  %1546 = vmatpush1.bf16.msra.mxu0 0
  %1547 = vmatprep.subr.bf16.mxu0 0
  %1548 = vmatpush1.bf16.msra.mxu0 0
  %1549 = vmatprep.subr.bf16.mxu0 0
  %1550 = vmatpush1.bf16.msra.mxu0 0
  %1551 = vmatprep.mubr.bf16.mxu0 0
  %1552 = vmatmul.mubr.bf16.gmra.mrb[0].mxu0 %v438
  %v1553 = vpop.f32.mrb[0].mxu0
  %v1554 = vadd.f32 %v1431, %v1553
  %v1555 = vpop.f32.mrb[0].mxu0
  %v1556 = vpop.f32.mrb[0].mxu0
  %v1557 = vadd.f32 %v1434, %v1556
  %v1558 = vpop.f32.mrb[0].mxu0
  %1559 = vmatprep.mubr.bf16.mxu0 0
  %1560 = vmatmul.mubr.bf16.gmra.mrb[0].mxu0 %v441
  %v1561 = vpop.f32.mrb[0].mxu0
  %v1562 = vadd.f32 %v1439, %v1561
  %v1563 = vpop.f32.mrb[0].mxu0
  %v1564 = vpop.f32.mrb[0].mxu0
  %v1565 = vadd.f32 %v1442, %v1564
  %v1566 = vpop.f32.mrb[0].mxu0
  %1567 = vmatprep.mubr.bf16.mxu0 0
  %1568 = vmatmul.mubr.bf16.gmra.mrb[0].mxu0 %v444
  %v1569 = vpop.f32.mrb[0].mxu0
  %v1570 = vadd.f32 %v1447, %v1569
  %v1571 = vpop.f32.mrb[0].mxu0
  %v1572 = vpop.f32.mrb[0].mxu0
  %v1573 = vadd.f32 %v1450, %v1572
  %v1574 = vpop.f32.mrb[0].mxu0
  %1575 = vmatprep.mubr.bf16.mxu0 0
  %1576 = vmatmul.mubr.bf16.gmra.mrb[0].mxu0 %v447
  %v1577 = vpop.f32.mrb[0].mxu0
  %v1578 = vadd.f32 %v1455, %v1577
  %v1579 = vpop.f32.mrb[0].mxu0
  %v1580 = vpop.f32.mrb[0].mxu0
  %v1581 = vadd.f32 %v1458, %v1580
  %v1582 = vpop.f32.mrb[0].mxu0
  %1583 = vmatprep.mubr.bf16.mxu0 0
  %1584 = vmatmul.mubr.bf16.gmra.mrb[0].mxu0 %v450
  %v1585 = vpop.f32.mrb[0].mxu0
  %v1586 = vadd.f32 %v1463, %v1585
  %v1587 = vpop.f32.mrb[0].mxu0
  %v1588 = vpop.f32.mrb[0].mxu0
  %v1589 = vadd.f32 %v1466, %v1588
  %v1590 = vpop.f32.mrb[0].mxu0
  %1591 = vmatprep.mubr.bf16.mxu0 0
  %1592 = vmatmul.mubr.bf16.gmra.mrb[0].mxu0 %v453
  %v1593 = vpop.f32.mrb[0].mxu0
  %v1594 = vadd.f32 %v1471, %v1593
  %v1595 = vpop.f32.mrb[0].mxu0
  %v1596 = vpop.f32.mrb[0].mxu0
  %v1597 = vadd.f32 %v1474, %v1596
  %v1598 = vpop.f32.mrb[0].mxu0
  %1599 = vmatprep.mubr.bf16.mxu0 0
  %1600 = vmatmul.mubr.bf16.gmra.mrb[0].mxu0 %v456
  %v1601 = vpop.f32.mrb[0].mxu0
  %v1602 = vadd.f32 %v1479, %v1601
  %v1603 = vpop.f32.mrb[0].mxu0
  %v1604 = vpop.f32.mrb[0].mxu0
  %v1605 = vadd.f32 %v1482, %v1604
  %v1606 = vpop.f32.mrb[0].mxu0
  %1607 = vmatprep.mubr.bf16.mxu0 0
  %1608 = vmatmul.mubr.bf16.gmra.mrb[0].mxu0 %v459
  %v1609 = vpop.f32.mrb[0].mxu0
  %v1610 = vadd.f32 %v1487, %v1609
  %v1611 = vpop.f32.mrb[0].mxu0
  %v1612 = vpop.f32.mrb[0].mxu0
  %v1613 = vadd.f32 %v1490, %v1612
  %v1614 = vpop.f32.mrb[0].mxu0
  %1615 = vmatprep.mubr.bf16.mxu0 0
  %1616 = vmatmul.mubr.bf16.gmra.mrb[0].mxu0 %v462
  %v1617 = vpop.f32.mrb[0].mxu0
  %v1618 = vadd.f32 %v1495, %v1617
  %v1619 = vpop.f32.mrb[0].mxu0
  %v1620 = vpop.f32.mrb[0].mxu0
  %v1621 = vadd.f32 %v1498, %v1620
  %v1622 = vpop.f32.mrb[0].mxu0
  %1623 = vmatprep.mubr.bf16.mxu0 0
  %1624 = vmatmul.mubr.bf16.gmra.mrb[0].mxu0 %v465
  %v1625 = vpop.f32.mrb[0].mxu0
  %v1626 = vadd.f32 %v1503, %v1625
  %v1627 = vpop.f32.mrb[0].mxu0
  %v1628 = vpop.f32.mrb[0].mxu0
  %v1629 = vadd.f32 %v1506, %v1628
  %v1630 = vpop.f32.mrb[0].mxu0
  %1631 = vmatprep.mubr.bf16.mxu0 0
  %1632 = vmatmul.mubr.bf16.gmra.mrb[0].mxu0 %v468
  %v1633 = vpop.f32.mrb[0].mxu0
  %v1634 = vadd.f32 %v1511, %v1633
  %v1635 = vpop.f32.mrb[0].mxu0
  %v1636 = vpop.f32.mrb[0].mxu0
  %v1637 = vpop.f32.mrb[0].mxu0
  %1638 = vdwg.mxu0
  %s1639 = scalar_lea.vmem %s1, 32
  %v1640 = vld [vmem:[%s1639] sm:$0xf]
  %v1642 = vsel %vm314, %v1640, 0
  %1644 = vmatprep.subr.bf16.mxu0 0
  %1645 = vmatpush1.bf16.msra.mxu0 %v1642
  %1646 = vmatprep.subr.bf16.mxu0 0
  %1647 = vmatpush1.bf16.msra.mxu0 0
  %1648 = vmatprep.subr.bf16.mxu0 0
  %1649 = vmatpush1.bf16.msra.mxu0 0
  %1650 = vmatprep.subr.bf16.mxu0 0
  %1651 = vmatpush1.bf16.msra.mxu0 0
  %1652 = vmatprep.subr.bf16.mxu0 0
  %1653 = vmatpush1.bf16.msra.mxu0 0
  %1654 = vmatprep.subr.bf16.mxu0 0
  %1655 = vmatpush1.bf16.msra.mxu0 0
  %1656 = vmatprep.subr.bf16.mxu0 0
  %1657 = vmatpush1.bf16.msra.mxu0 0
  %1658 = vmatprep.subr.bf16.mxu0 0
  %1659 = vmatpush1.bf16.msra.mxu0 0
  %1660 = vmatprep.subr.bf16.mxu0 0
  %1661 = vmatpush1.bf16.msra.mxu0 0
  %1662 = vmatprep.subr.bf16.mxu0 0
  %1663 = vmatpush1.bf16.msra.mxu0 0
  %1664 = vmatprep.subr.bf16.mxu0 0
  %1665 = vmatpush1.bf16.msra.mxu0 0
  %1666 = vmatprep.subr.bf16.mxu0 0
  %1667 = vmatpush1.bf16.msra.mxu0 0
  %1668 = vmatprep.subr.bf16.mxu0 0
  %1669 = vmatpush1.bf16.msra.mxu0 0
  %1670 = vmatprep.subr.bf16.mxu0 0
  %1671 = vmatpush1.bf16.msra.mxu0 0
  %1672 = vmatprep.subr.bf16.mxu0 0
  %1673 = vmatpush1.bf16.msra.mxu0 0
  %1674 = vmatprep.subr.bf16.mxu0 0
  %1675 = vmatpush1.bf16.msra.mxu0 0
  %1676 = vmatprep.mubr.bf16.mxu0 0
  %1677 = vmatmul.mubr.bf16.gmra.mrb[0].mxu0 %v716
  %v1678 = vpop.f32.mrb[0].mxu0
  %v1679 = vadd.f32 0.0, %v1678
  %v1680 = vpop.f32.mrb[0].mxu0
  %v1681 = vpop.f32.mrb[0].mxu0
  %v1682 = vadd.f32 0.0, %v1681
  %v1683 = vpop.f32.mrb[0].mxu0
  %1684 = vmatprep.mubr.bf16.mxu0 0
  %1685 = vmatmul.mubr.bf16.gmra.mrb[0].mxu0 %v719
  %v1686 = vpop.f32.mrb[0].mxu0
  %v1687 = vadd.f32 0.0, %v1686
  %v1688 = vpop.f32.mrb[0].mxu0
  %v1689 = vpop.f32.mrb[0].mxu0
  %v1690 = vadd.f32 0.0, %v1689
  %v1691 = vpop.f32.mrb[0].mxu0
  %1692 = vmatprep.mubr.bf16.mxu0 0
  %1693 = vmatmul.mubr.bf16.gmra.mrb[0].mxu0 %v722
  %v1694 = vpop.f32.mrb[0].mxu0
  %v1695 = vadd.f32 0.0, %v1694
  %v1696 = vpop.f32.mrb[0].mxu0
  %v1697 = vpop.f32.mrb[0].mxu0
  %v1698 = vadd.f32 0.0, %v1697
  %v1699 = vpop.f32.mrb[0].mxu0
  %1700 = vmatprep.mubr.bf16.mxu0 0
  %1701 = vmatmul.mubr.bf16.gmra.mrb[0].mxu0 %v725
  %v1702 = vpop.f32.mrb[0].mxu0
  %v1703 = vadd.f32 0.0, %v1702
  %v1704 = vpop.f32.mrb[0].mxu0
  %v1705 = vpop.f32.mrb[0].mxu0
  %v1706 = vadd.f32 0.0, %v1705
  %v1707 = vpop.f32.mrb[0].mxu0
  %1708 = vmatprep.mubr.bf16.mxu0 0
  %1709 = vmatmul.mubr.bf16.gmra.mrb[0].mxu0 %v728
  %v1710 = vpop.f32.mrb[0].mxu0
  %v1711 = vadd.f32 0.0, %v1710
  %v1712 = vpop.f32.mrb[0].mxu0
  %v1713 = vpop.f32.mrb[0].mxu0
  %v1714 = vadd.f32 0.0, %v1713
  %v1715 = vpop.f32.mrb[0].mxu0
  %1716 = vmatprep.mubr.bf16.mxu0 0
  %1717 = vmatmul.mubr.bf16.gmra.mrb[0].mxu0 %v731
  %v1718 = vpop.f32.mrb[0].mxu0
  %v1719 = vadd.f32 0.0, %v1718
  %v1720 = vpop.f32.mrb[0].mxu0
  %v1721 = vpop.f32.mrb[0].mxu0
  %v1722 = vadd.f32 0.0, %v1721
  %v1723 = vpop.f32.mrb[0].mxu0
  %1724 = vmatprep.mubr.bf16.mxu0 0
  %1725 = vmatmul.mubr.bf16.gmra.mrb[0].mxu0 %v734
  %v1726 = vpop.f32.mrb[0].mxu0
  %v1727 = vadd.f32 0.0, %v1726
  %v1728 = vpop.f32.mrb[0].mxu0
  %v1729 = vpop.f32.mrb[0].mxu0
  %v1730 = vadd.f32 0.0, %v1729
  %v1731 = vpop.f32.mrb[0].mxu0
  %1732 = vmatprep.mubr.bf16.mxu0 0
  %1733 = vmatmul.mubr.bf16.gmra.mrb[0].mxu0 %v737
  %v1734 = vpop.f32.mrb[0].mxu0
  %v1735 = vadd.f32 0.0, %v1734
  %v1736 = vpop.f32.mrb[0].mxu0
  %v1737 = vpop.f32.mrb[0].mxu0
  %v1738 = vadd.f32 0.0, %v1737
  %v1739 = vpop.f32.mrb[0].mxu0
  %1740 = vmatprep.mubr.bf16.mxu0 0
  %1741 = vmatmul.mubr.bf16.gmra.mrb[0].mxu0 %v740
  %v1742 = vpop.f32.mrb[0].mxu0
  %v1743 = vadd.f32 0.0, %v1742
  %v1744 = vpop.f32.mrb[0].mxu0
  %v1745 = vpop.f32.mrb[0].mxu0
  %v1746 = vadd.f32 0.0, %v1745
  %v1747 = vpop.f32.mrb[0].mxu0
  %1748 = vmatprep.mubr.bf16.mxu0 0
  %1749 = vmatmul.mubr.bf16.gmra.mrb[0].mxu0 %v743
  %v1750 = vpop.f32.mrb[0].mxu0
  %v1751 = vadd.f32 0.0, %v1750
  %v1752 = vpop.f32.mrb[0].mxu0
  %v1753 = vpop.f32.mrb[0].mxu0
  %v1754 = vadd.f32 0.0, %v1753
  %v1755 = vpop.f32.mrb[0].mxu0
  %1756 = vmatprep.mubr.bf16.mxu0 0
  %1757 = vmatmul.mubr.bf16.gmra.mrb[0].mxu0 %v746
  %v1758 = vpop.f32.mrb[0].mxu0
  %v1759 = vadd.f32 0.0, %v1758
  %v1760 = vpop.f32.mrb[0].mxu0
  %v1761 = vpop.f32.mrb[0].mxu0
  %v1762 = vpop.f32.mrb[0].mxu0
  %1763 = vdwg.mxu0
  %v1764 = vadd.f32 %v1554, %v1679
  %v1765 = vadd.f32 %v1557, %v1682
  %v1766 = vadd.f32 %v1562, %v1687
  %v1767 = vadd.f32 %v1565, %v1690
  %v1768 = vadd.f32 %v1570, %v1695
  %v1769 = vadd.f32 %v1573, %v1698
  %v1770 = vadd.f32 %v1578, %v1703
  %v1771 = vadd.f32 %v1581, %v1706
  %v1772 = vadd.f32 %v1586, %v1711
  %v1773 = vadd.f32 %v1589, %v1714
  %v1774 = vadd.f32 %v1594, %v1719
  %v1775 = vadd.f32 %v1597, %v1722
  %v1776 = vadd.f32 %v1602, %v1727
  %v1777 = vadd.f32 %v1605, %v1730
  %v1778 = vadd.f32 %v1610, %v1735
  %v1779 = vadd.f32 %v1613, %v1738
  %v1780 = vadd.f32 %v1618, %v1743
  %v1781 = vadd.f32 %v1621, %v1746
  %v1782 = vadd.f32 %v1626, %v1751
  %v1783 = vadd.f32 %v1629, %v1754
  %v1784 = vadd.f32 %v1634, %v1759
  %vm1806 = vcmask 1045504
  %v1807 = vrot.slane %v1764, 2
  %v1808 = vrot.slane %v1765, 2
  %v1809 = vsel %vm1806, %v1807, %v1808
  %v1810 = vrot.slane %v1766, 2
  %v1811 = vsel %vm1806, %v1808, %v1810
  %v1812 = vrot.slane %v1767, 2
  %v1813 = vsel %vm1806, %v1810, %v1812
  %v1814 = vrot.slane %v1768, 2
  %v1815 = vsel %vm1806, %v1812, %v1814
  %v1816 = vrot.slane %v1769, 2
  %v1817 = vsel %vm1806, %v1814, %v1816
  %v1818 = vrot.slane %v1770, 2
  %v1819 = vsel %vm1806, %v1816, %v1818
  %v1820 = vrot.slane %v1771, 2
  %v1821 = vsel %vm1806, %v1818, %v1820
  %v1822 = vrot.slane %v1772, 2
  %v1823 = vsel %vm1806, %v1820, %v1822
  %v1824 = vrot.slane %v1773, 2
  %v1825 = vsel %vm1806, %v1822, %v1824
  %v1826 = vrot.slane %v1774, 2
  %v1827 = vsel %vm1806, %v1824, %v1826
  %v1828 = vrot.slane %v1775, 2
  %v1829 = vsel %vm1806, %v1826, %v1828
  %v1830 = vrot.slane %v1776, 2
  %v1831 = vsel %vm1806, %v1828, %v1830
  %v1832 = vrot.slane %v1777, 2
  %v1833 = vsel %vm1806, %v1830, %v1832
  %v1834 = vrot.slane %v1778, 2
  %v1835 = vsel %vm1806, %v1832, %v1834
  %v1836 = vrot.slane %v1779, 2
  %v1837 = vsel %vm1806, %v1834, %v1836
  %v1838 = vrot.slane %v1780, 2
  %v1839 = vsel %vm1806, %v1836, %v1838
  %v1840 = vrot.slane %v1781, 2
  %v1841 = vsel %vm1806, %v1838, %v1840
  %v1842 = vrot.slane %v1782, 2
  %v1843 = vsel %vm1806, %v1840, %v1842
  %v1844 = vrot.slane %v1783, 2
  %v1845 = vsel %vm1806, %v1842, %v1844
  %v1846 = vrot.slane %v1784, 2
  %v1847 = vsel %vm1806, %v1844, %v1846
  %v1868 = vadd.f32 %v1369, %v1809
  %v1869 = vadd.f32 %v1370, %v1811
  %v1870 = vadd.f32 %v1371, %v1813
  %v1871 = vadd.f32 %v1372, %v1815
  %v1872 = vadd.f32 %v1373, %v1817
  %v1873 = vadd.f32 %v1374, %v1819
  %v1874 = vadd.f32 %v1375, %v1821
  %v1875 = vadd.f32 %v1376, %v1823
  %v1876 = vadd.f32 %v1377, %v1825
  %v1877 = vadd.f32 %v1378, %v1827
  %v1878 = vadd.f32 %v1379, %v1829
  %v1879 = vadd.f32 %v1380, %v1831
  %v1880 = vadd.f32 %v1381, %v1833
  %v1881 = vadd.f32 %v1382, %v1835
  %v1882 = vadd.f32 %v1383, %v1837
  %v1883 = vadd.f32 %v1384, %v1839
  %v1884 = vadd.f32 %v1385, %v1841
  %v1885 = vadd.f32 %v1386, %v1843
  %v1886 = vadd.f32 %v1387, %v1845
  %v1887 = vadd.f32 %v1388, %v1847
  %v1888 = vld [vmem:[%s2] sm:$0x1]
  %v1890 = vlaneseq
  %v1891 = vshrl.u32 %v1890, 7
  %v1892 = vsub.s32 0, %v1891
  %v1893 = vrot.slane %v1888, %v1892
  %v1895 = vadd.f32 %v1868, %v1893
  %v1896 = vadd.f32 %v1869, %v1893
  %v1897 = vadd.f32 %v1870, %v1893
  %v1898 = vadd.f32 %v1871, %v1893
  %v1899 = vadd.f32 %v1872, %v1893
  %v1900 = vadd.f32 %v1873, %v1893
  %v1901 = vadd.f32 %v1874, %v1893
  %v1902 = vadd.f32 %v1875, %v1893
  %v1903 = vadd.f32 %v1876, %v1893
  %v1904 = vadd.f32 %v1877, %v1893
  %v1905 = vadd.f32 %v1878, %v1893
  %v1906 = vadd.f32 %v1879, %v1893
  %v1907 = vadd.f32 %v1880, %v1893
  %v1908 = vadd.f32 %v1881, %v1893
  %v1909 = vadd.f32 %v1882, %v1893
  %v1910 = vadd.f32 %v1883, %v1893
  %v1911 = vadd.f32 %v1884, %v1893
  %v1912 = vadd.f32 %v1885, %v1893
  %v1913 = vadd.f32 %v1886, %v1893
  %v1914 = vadd.f32 %v1887, %v1893
  %vm1915 = vcmask 130048
  %1916 = vst.msk [vmem:[%s5] sm:$0xff] %vm1915, %v1895
  %1917 = vst.msk [vmem:[%s5 + $0x8] sm:$0xff] %vm1915, %v1896
  %1918 = vst.msk [vmem:[%s5 + $0x10] sm:$0xff] %vm1915, %v1897
  %1919 = vst.msk [vmem:[%s5 + $0x18] sm:$0xff] %vm1915, %v1898
  %1920 = vst.msk [vmem:[%s5 + $0x20] sm:$0xff] %vm1915, %v1899
  %1921 = vst.msk [vmem:[%s5 + $0x28] sm:$0xff] %vm1915, %v1900
  %1922 = vst.msk [vmem:[%s5 + $0x30] sm:$0xff] %vm1915, %v1901
  %1923 = vst.msk [vmem:[%s5 + $0x38] sm:$0xff] %vm1915, %v1902
  %1924 = vst.msk [vmem:[%s5 + $0x40] sm:$0xff] %vm1915, %v1903
  %1925 = vst.msk [vmem:[%s5 + $0x48] sm:$0xff] %vm1915, %v1904
  %1926 = vst.msk [vmem:[%s5 + $0x50] sm:$0xff] %vm1915, %v1905
  %1927 = vst.msk [vmem:[%s5 + $0x58] sm:$0xff] %vm1915, %v1906
  %1928 = vst.msk [vmem:[%s5 + $0x60] sm:$0xff] %vm1915, %v1907
  %1929 = vst.msk [vmem:[%s5 + $0x68] sm:$0xff] %vm1915, %v1908
  %1930 = vst.msk [vmem:[%s5 + $0x70] sm:$0xff] %vm1915, %v1909
  %1931 = vst.msk [vmem:[%s5 + $0x78] sm:$0xff] %vm1915, %v1910
  %1932 = vst.msk [vmem:[%s5 + $0x80] sm:$0xff] %vm1915, %v1911
  %1933 = vst.msk [vmem:[%s5 + $0x88] sm:$0xff] %vm1915, %v1912
  %1934 = vst.msk [vmem:[%s5 + $0x90] sm:$0xff] %vm1915, %v1913
  %1935 = vst.msk [vmem:[%s5 + $0x98] sm:$0xff] %vm1915, %v1914
  // Predicated region
  $region22: #{tpu_custom_call.1} parent=0 // pred_check
    _
  $region23: #{tpu_custom_call.1} parent=0 // pred_check_branch
    %1937 = sbr.rel (0) target = $region25
  $region24: #{tpu_custom_call.1} parent=0 // pred_region
    _
  $region25: #{tpu_custom_call.1} parent=0 // pred_fallthru
    _
  // Predicated region
  $region26: #{tpu_custom_call.1} parent=0 // pred_check
    _
  $region27: #{tpu_custom_call.1} parent=0 // pred_check_branch
    %1939 = sbr.rel (0) target = $region29
  $region28: #{tpu_custom_call.1} parent=0 // pred_region
    _
  $region29: #{tpu_custom_call.1} parent=0 // pred_fallthru
    _

</llo_original>
